<compile_context>
chip_gen: v5e
topology: v5e:2x2
jax: 0.10.0
libtpu: 0.0.40
codegen_flags: <defaults>
</compile_context>

<pallas_src>
import math

import jax
import jax.numpy as jnp
import numpy as np
from jax.experimental import pallas as pl
from jax.experimental.pallas import tpu as pltpu


# ------------------------------ fused kernel ---------------------------------

def make_fused_kernel(S, H, num_layers):
    def kernel(*refs):
        # refs = [x] + [wih_t, whh_t, b] * num_layers + [wfc_t, bfc]
        #        + [out] + [hseq_scratch, gates_scratch]
        x_ref = refs[0]
        layer_refs = []
        idx = 1
        for _ in range(num_layers):
            layer_refs.append((refs[idx], refs[idx + 1], refs[idx + 2]))
            idx += 3
        wfc_ref = refs[idx]
        bfc_ref = refs[idx + 1]
        out_ref = refs[idx + 2]
        hseq_ref = refs[idx + 3]     # VMEM (S, H): hidden sequence of current layer
        gates_ref = refs[idx + 4]    # VMEM (S, 4H): hoisted input projection

        for layer, (wih_ref, whh_ref, b_ref) in enumerate(layer_refs):
            # Hoisted input projection + folded bias for the whole sequence.
            src = x_ref[...] if layer == 0 else hseq_ref[...]
            gates_ref[...] = (
                jnp.dot(src, wih_ref[...], preferred_element_type=jnp.float32)
                + b_ref[...]
            )

            whh = whh_ref[...]                       # (H, 4H), loaded once per layer
            h = jnp.zeros((1, H), jnp.float32)
            c = jnp.zeros((1, H), jnp.float32)

            # Static unroll over time (S is small); only h @ Whh is serial.
            for t in range(S):
                g = gates_ref[pl.ds(t, 1), :] + jnp.dot(
                    h, whh, preferred_element_type=jnp.float32)   # (1, 4H)
                i = jax.nn.sigmoid(g[:, 0 * H:1 * H])
                f = jax.nn.sigmoid(g[:, 1 * H:2 * H])
                gg = jnp.tanh(g[:, 2 * H:3 * H])
                o = jax.nn.sigmoid(g[:, 3 * H:4 * H])
                c = f * c + i * gg
                h = o * jnp.tanh(c)
                hseq_ref[pl.ds(t, 1), :] = h

        # B == 1: softmax of the 1x1 score is 1 and the batch-sum is identity,
        # so attn_output == hseq; fuse the final Linear as the epilogue.
        out_ref[...] = (
            jnp.dot(hseq_ref[...], wfc_ref[...], preferred_element_type=jnp.float32)
            + bfc_ref[...]
        )

    return kernel


def lstm_regression_forward(x, params):
    """x: (S, B, I) with B == 1. Returns (S, B, output_size)."""
    S, B, I = x.shape
    if B != 1:
        raise ValueError("LSTM_Regression forward requires B == 1 (implied by .view(s, b, -1)).")
    num_layers = len(params["lstm"])
    H = params["lstm"][0][1].shape[1]          # whh: (4H, H)
    O = params["fc_w"].shape[0]

    x2d = x.reshape(S, I)

    inputs = [x2d]
    in_specs = [pl.BlockSpec((S, I), lambda i: (0, 0))]
    for (wih, whh, bih, bhh) in params["lstm"]:
        wih_t = wih.T                            # (in_sz, 4H)
        whh_t = whh.T                            # (H, 4H)
        b = (bih + bhh)[None, :]                 # (1, 4H)
        inputs += [wih_t, whh_t, b]
        in_specs += [
            pl.BlockSpec(wih_t.shape, lambda i: (0, 0)),
            pl.BlockSpec(whh_t.shape, lambda i: (0, 0)),
            pl.BlockSpec(b.shape, lambda i: (0, 0)),
        ]
    wfc_t = params["fc_w"].T                     # (H, O)
    bfc = params["fc_b"][None, :]                # (1, O)
    inputs += [wfc_t, bfc]
    in_specs += [
        pl.BlockSpec(wfc_t.shape, lambda i: (0, 0)),
        pl.BlockSpec(bfc.shape, lambda i: (0, 0)),
    ]

    out = pl.pallas_call(
        make_fused_kernel(S, H, num_layers),
        out_shape=jax.ShapeDtypeStruct((S, O), jnp.float32),
        grid_spec=pltpu.PrefetchScalarGridSpec(
            num_scalar_prefetch=0,
            grid=(1,),
            in_specs=in_specs,
            out_specs=pl.BlockSpec((S, O), lambda i: (0, 0)),
            scratch_shapes=[
                pltpu.VMEM((S, H), jnp.float32),        # hidden sequence
                pltpu.VMEM((S, 4 * H), jnp.float32),    # hoisted gate projections
            ],
        ),
        compiler_params=pltpu.CompilerParams(
            dimension_semantics=("arbitrary",)),
    )(*inputs)
    return out.reshape(S, B, O)


# ------------------------------ init + reference ------------------------------

def init_params(key, input_size, hidden_size, output_size, num_layers):
    k = 1.0 / math.sqrt(hidden_size)
    params = {"lstm": []}
    for layer in range(num_layers):
        in_sz = input_size if layer == 0 else hidden_size
        key, k1, k2, k3, k4 = jax.random.split(key, 5)
        wih = jax.random.uniform(k1, (4 * hidden_size, in_sz), jnp.float32, -k, k)
        whh = jax.random.uniform(k2, (4 * hidden_size, hidden_size), jnp.float32, -k, k)
        bih = jax.random.uniform(k3, (4 * hidden_size,), jnp.float32, -k, k)
        bhh = jax.random.uniform(k4, (4 * hidden_size,), jnp.float32, -k, k)
        params["lstm"].append((wih, whh, bih, bhh))
    key, k5, k6 = jax.random.split(key, 3)
    params["fc_w"] = jax.random.uniform(k5, (output_size, hidden_size), jnp.float32, -k, k)
    params["fc_b"] = jax.random.uniform(k6, (output_size,), jnp.float32, -k, k)
    return params


def reference_forward(x, params):
    """Pure-JAX replica of the PyTorch forward (eval mode), general in B."""
    S, B, _ = x.shape
    inp = x
    for (wih, whh, bih, bhh) in params["lstm"]:
        H = whh.shape[1]
        h = jnp.zeros((B, H), jnp.float32)
        c = jnp.zeros((B, H), jnp.float32)
        outs = []
        for t in range(S):
            gates = inp[t] @ wih.T + bih + h @ whh.T + bhh
            i = jax.nn.sigmoid(gates[:, :H])
            f = jax.nn.sigmoid(gates[:, H:2 * H])
            g = jnp.tanh(gates[:, 2 * H:3 * H])
            o = jax.nn.sigmoid(gates[:, 3 * H:])
            c = f * c + i * g
            h = o * jnp.tanh(c)
            outs.append(h)
        inp = jnp.stack(outs)
    xh = inp                                              # (S, B, H)
    H = xh.shape[-1]
    scores = jnp.einsum("sbh,sch->sbc", xh, xh) / math.sqrt(H)
    p = jax.nn.softmax(scores, axis=-1)
    ctx = jnp.einsum("sbc,sch->sbh", p, xh).sum(axis=1)   # (S, H)
    out = ctx @ params["fc_w"].T + params["fc_b"]         # (S, O)
    return out.reshape(S, B, -1)


if __name__ == "__main__":
    S, B, I, H, O, L = 8, 1, 16, 32, 1, 2   # B must be 1 (implied by x.view(s, b, -1))

    key = jax.random.PRNGKey(0)
    key, kx = jax.random.split(key)
    x = jax.random.normal(kx, (S, B, I), dtype=jnp.float32)
    params = init_params(key, I, H, O, L)

    out = lstm_regression_forward(x, params)
    out = jax.block_until_ready(out)

    ref = reference_forward(x, params)
    np.testing.assert_allclose(np.asarray(out), np.asarray(ref), rtol=2e-4, atol=2e-5)
    assert out.shape == (S, B, O)

    print("KERNEL_OK")
</pallas_src>

<mosaic_0001>
module attributes {stable_mosaic.version = 11 : i64} {
  func.func @kernel(%arg0: i32, %arg1: memref<8x16xf32, #tpu.memory_space<vmem>>, %arg2: memref<16x128xf32, #tpu.memory_space<vmem>>, %arg3: memref<32x128xf32, #tpu.memory_space<vmem>>, %arg4: memref<1x128xf32, #tpu.memory_space<vmem>>, %arg5: memref<32x128xf32, #tpu.memory_space<vmem>>, %arg6: memref<32x128xf32, #tpu.memory_space<vmem>>, %arg7: memref<1x128xf32, #tpu.memory_space<vmem>>, %arg8: memref<32x1xf32, #tpu.memory_space<vmem>>, %arg9: memref<1x1xf32, #tpu.memory_space<vmem>>, %arg10: memref<8x1xf32, #tpu.memory_space<vmem>>, %arg11: memref<8x32xf32, #tpu.memory_space<vmem>>, %arg12: memref<8x128xf32, #tpu.memory_space<vmem>>) attributes {dimension_semantics = [#tpu.dimension_semantics<arbitrary>], iteration_bounds = array<i64: 1>, scalar_prefetch = 0 : i64, scratch_operands = 2 : i64, tpu.core_type = #tpu.core_type<tc>, window_params = [{pipeline_mode = #tpu.pipeline_mode<synchronous>, transform_indices = @transform_0, window_bounds = array<i64: 8, 16>}, {pipeline_mode = #tpu.pipeline_mode<synchronous>, transform_indices = @transform_1, window_bounds = array<i64: 16, 128>}, {pipeline_mode = #tpu.pipeline_mode<synchronous>, transform_indices = @transform_2, window_bounds = array<i64: 32, 128>}, {pipeline_mode = #tpu.pipeline_mode<synchronous>, transform_indices = @transform_3, window_bounds = array<i64: 1, 128>}, {pipeline_mode = #tpu.pipeline_mode<synchronous>, transform_indices = @transform_4, window_bounds = array<i64: 32, 128>}, {pipeline_mode = #tpu.pipeline_mode<synchronous>, transform_indices = @transform_5, window_bounds = array<i64: 32, 128>}, {pipeline_mode = #tpu.pipeline_mode<synchronous>, transform_indices = @transform_6, window_bounds = array<i64: 1, 128>}, {pipeline_mode = #tpu.pipeline_mode<synchronous>, transform_indices = @transform_7, window_bounds = array<i64: 32, 1>}, {pipeline_mode = #tpu.pipeline_mode<synchronous>, transform_indices = @transform_8, window_bounds = array<i64: 1, 1>}, {pipeline_mode = #tpu.pipeline_mode<synchronous>, transform_indices = @transform_9, window_bounds = array<i64: 8, 1>}]} {
    %c0 = arith.constant 0 : index
    %c0_0 = arith.constant 0 : index
    %0 = vector.load %arg1[%c0, %c0_0] : memref<8x16xf32, #tpu.memory_space<vmem>>, vector<8x16xf32>
    %c0_1 = arith.constant 0 : index
    %c0_2 = arith.constant 0 : index
    %1 = vector.load %arg2[%c0_1, %c0_2] : memref<16x128xf32, #tpu.memory_space<vmem>>, vector<16x128xf32>
    %cst = arith.constant dense<0.000000e+00> : vector<8x128xf32>
    %2 = tpu.matmul %0, %1, %cst {dimension_numbers = #tpu.dot_dimension_numbers<[1], [0], [0], [1], [0, 0, 1, 1], [], []>} : vector<8x16xf32>, vector<16x128xf32>, vector<8x128xf32> -> vector<8x128xf32>
    %c0_3 = arith.constant 0 : index
    %c0_4 = arith.constant 0 : index
    %3 = vector.load %arg4[%c0_3, %c0_4] : memref<1x128xf32, #tpu.memory_space<vmem>>, vector<1x128xf32>
    %4 = vector.broadcast %3 : vector<1x128xf32> to vector<8x128xf32>
    %5 = arith.addf %2, %4 : vector<8x128xf32>
    %c0_5 = arith.constant 0 : index
    %c0_6 = arith.constant 0 : index
    %6 = vector.load %arg12[%c0_5, %c0_6] : memref<8x128xf32, #tpu.memory_space<vmem>>, vector<8x128xf32>
    tpu.vector_store %arg12[%c0_5, %c0_6], %5 {strides = array<i32>} : memref<8x128xf32, #tpu.memory_space<vmem>>, vector<8x128xf32>,
    %c0_7 = arith.constant 0 : index
    %c0_8 = arith.constant 0 : index
    %7 = vector.load %arg3[%c0_7, %c0_8] : memref<32x128xf32, #tpu.memory_space<vmem>>, vector<32x128xf32>
    %cst_9 = arith.constant 0.000000e+00 : f32
    %8 = vector.broadcast %cst_9 : f32 to vector<1x32xf32>
    %cst_10 = arith.constant 0.000000e+00 : f32
    %9 = vector.broadcast %cst_10 : f32 to vector<1x32xf32>
    %c0_11 = arith.constant 0 : index
    %c0_12 = arith.constant 0 : index
    %10 = vector.load %arg12[%c0_11, %c0_12] : memref<8x128xf32, #tpu.memory_space<vmem>>, vector<1x128xf32>
    %cst_13 = arith.constant dense<0.000000e+00> : vector<1x128xf32>
    %11 = tpu.matmul %8, %7, %cst_13 {dimension_numbers = #tpu.dot_dimension_numbers<[1], [0], [0], [1], [0, 0, 1, 1], [], []>} : vector<1x32xf32>, vector<32x128xf32>, vector<1x128xf32> -> vector<1x128xf32>
    %12 = arith.addf %10, %11 : vector<1x128xf32>
    %13 = vector.extract_strided_slice %12 {offsets = [0, 0], sizes = [1, 32], strides = [1, 1]} : vector<1x128xf32> to vector<1x32xf32>
    %14 = arith.negf %13 : vector<1x32xf32>
    %15 = math.exp %14 : vector<1x32xf32>
    %cst_14 = arith.constant 1.000000e+00 : f32
    %16 = vector.broadcast %cst_14 : f32 to vector<1x32xf32>
    %17 = arith.addf %16, %15 : vector<1x32xf32>
    %18 = arith.divf %16, %17 : vector<1x32xf32>
    %19 = vector.extract_strided_slice %12 {offsets = [0, 32], sizes = [1, 32], strides = [1, 1]} : vector<1x128xf32> to vector<1x32xf32>
    %20 = arith.negf %19 : vector<1x32xf32>
    %21 = math.exp %20 : vector<1x32xf32>
    %cst_15 = arith.constant 1.000000e+00 : f32
    %22 = vector.broadcast %cst_15 : f32 to vector<1x32xf32>
    %23 = arith.addf %22, %21 : vector<1x32xf32>
    %24 = arith.divf %22, %23 : vector<1x32xf32>
    %25 = vector.extract_strided_slice %12 {offsets = [0, 64], sizes = [1, 32], strides = [1, 1]} : vector<1x128xf32> to vector<1x32xf32>
    %26 = math.tanh %25 : vector<1x32xf32>
    %27 = vector.extract_strided_slice %12 {offsets = [0, 96], sizes = [1, 32], strides = [1, 1]} : vector<1x128xf32> to vector<1x32xf32>
    %28 = arith.negf %27 : vector<1x32xf32>
    %29 = math.exp %28 : vector<1x32xf32>
    %cst_16 = arith.constant 1.000000e+00 : f32
    %30 = vector.broadcast %cst_16 : f32 to vector<1x32xf32>
    %31 = arith.addf %30, %29 : vector<1x32xf32>
    %32 = arith.divf %30, %31 : vector<1x32xf32>
    %33 = arith.mulf %24, %9 : vector<1x32xf32>
    %34 = arith.mulf %18, %26 : vector<1x32xf32>
    %35 = arith.addf %33, %34 : vector<1x32xf32>
    %36 = math.tanh %35 : vector<1x32xf32>
    %37 = arith.mulf %32, %36 : vector<1x32xf32>
    %c0_17 = arith.constant 0 : index
    %c0_18 = arith.constant 0 : index
    %38 = vector.load %arg11[%c0_17, %c0_18] : memref<8x32xf32, #tpu.memory_space<vmem>>, vector<1x32xf32>
    tpu.vector_store %arg11[%c0_17, %c0_18], %37 {strides = array<i32>} : memref<8x32xf32, #tpu.memory_space<vmem>>, vector<1x32xf32>,
    %c1 = arith.constant 1 : index
    %c0_19 = arith.constant 0 : index
    %39 = vector.load %arg12[%c1, %c0_19] : memref<8x128xf32, #tpu.memory_space<vmem>>, vector<1x128xf32>
    %cst_20 = arith.constant dense<0.000000e+00> : vector<1x128xf32>
    %40 = tpu.matmul %37, %7, %cst_20 {dimension_numbers = #tpu.dot_dimension_numbers<[1], [0], [0], [1], [0, 0, 1, 1], [], []>} : vector<1x32xf32>, vector<32x128xf32>, vector<1x128xf32> -> vector<1x128xf32>
    %41 = arith.addf %39, %40 : vector<1x128xf32>
    %42 = vector.extract_strided_slice %41 {offsets = [0, 0], sizes = [1, 32], strides = [1, 1]} : vector<1x128xf32> to vector<1x32xf32>
    %43 = arith.negf %42 : vector<1x32xf32>
    %44 = math.exp %43 : vector<1x32xf32>
    %cst_21 = arith.constant 1.000000e+00 : f32
    %45 = vector.broadcast %cst_21 : f32 to vector<1x32xf32>
    %46 = arith.addf %45, %44 : vector<1x32xf32>
    %47 = arith.divf %45, %46 : vector<1x32xf32>
    %48 = vector.extract_strided_slice %41 {offsets = [0, 32], sizes = [1, 32], strides = [1, 1]} : vector<1x128xf32> to vector<1x32xf32>
    %49 = arith.negf %48 : vector<1x32xf32>
    %50 = math.exp %49 : vector<1x32xf32>
    %cst_22 = arith.constant 1.000000e+00 : f32
    %51 = vector.broadcast %cst_22 : f32 to vector<1x32xf32>
    %52 = arith.addf %51, %50 : vector<1x32xf32>
    %53 = arith.divf %51, %52 : vector<1x32xf32>
    %54 = vector.extract_strided_slice %41 {offsets = [0, 64], sizes = [1, 32], strides = [1, 1]} : vector<1x128xf32> to vector<1x32xf32>
    %55 = math.tanh %54 : vector<1x32xf32>
    %56 = vector.extract_strided_slice %41 {offsets = [0, 96], sizes = [1, 32], strides = [1, 1]} : vector<1x128xf32> to vector<1x32xf32>
    %57 = arith.negf %56 : vector<1x32xf32>
    %58 = math.exp %57 : vector<1x32xf32>
    %cst_23 = arith.constant 1.000000e+00 : f32
    %59 = vector.broadcast %cst_23 : f32 to vector<1x32xf32>
    %60 = arith.addf %59, %58 : vector<1x32xf32>
    %61 = arith.divf %59, %60 : vector<1x32xf32>
    %62 = arith.mulf %53, %35 : vector<1x32xf32>
    %63 = arith.mulf %47, %55 : vector<1x32xf32>
    %64 = arith.addf %62, %63 : vector<1x32xf32>
    %65 = math.tanh %64 : vector<1x32xf32>
    %66 = arith.mulf %61, %65 : vector<1x32xf32>
    %c1_24 = arith.constant 1 : index
    %c0_25 = arith.constant 0 : index
    %67 = vector.load %arg11[%c1_24, %c0_25] : memref<8x32xf32, #tpu.memory_space<vmem>>, vector<1x32xf32>
    tpu.vector_store %arg11[%c1_24, %c0_25], %66 {strides = array<i32>} : memref<8x32xf32, #tpu.memory_space<vmem>>, vector<1x32xf32>,
    %c2 = arith.constant 2 : index
    %c0_26 = arith.constant 0 : index
    %68 = vector.load %arg12[%c2, %c0_26] : memref<8x128xf32, #tpu.memory_space<vmem>>, vector<1x128xf32>
    %cst_27 = arith.constant dense<0.000000e+00> : vector<1x128xf32>
    %69 = tpu.matmul %66, %7, %cst_27 {dimension_numbers = #tpu.dot_dimension_numbers<[1], [0], [0], [1], [0, 0, 1, 1], [], []>} : vector<1x32xf32>, vector<32x128xf32>, vector<1x128xf32> -> vector<1x128xf32>
    %70 = arith.addf %68, %69 : vector<1x128xf32>
    %71 = vector.extract_strided_slice %70 {offsets = [0, 0], sizes = [1, 32], strides = [1, 1]} : vector<1x128xf32> to vector<1x32xf32>
    %72 = arith.negf %71 : vector<1x32xf32>
    %73 = math.exp %72 : vector<1x32xf32>
    %cst_28 = arith.constant 1.000000e+00 : f32
    %74 = vector.broadcast %cst_28 : f32 to vector<1x32xf32>
    %75 = arith.addf %74, %73 : vector<1x32xf32>
    %76 = arith.divf %74, %75 : vector<1x32xf32>
    %77 = vector.extract_strided_slice %70 {offsets = [0, 32], sizes = [1, 32], strides = [1, 1]} : vector<1x128xf32> to vector<1x32xf32>
    %78 = arith.negf %77 : vector<1x32xf32>
    %79 = math.exp %78 : vector<1x32xf32>
    %cst_29 = arith.constant 1.000000e+00 : f32
    %80 = vector.broadcast %cst_29 : f32 to vector<1x32xf32>
    %81 = arith.addf %80, %79 : vector<1x32xf32>
    %82 = arith.divf %80, %81 : vector<1x32xf32>
    %83 = vector.extract_strided_slice %70 {offsets = [0, 64], sizes = [1, 32], strides = [1, 1]} : vector<1x128xf32> to vector<1x32xf32>
    %84 = math.tanh %83 : vector<1x32xf32>
    %85 = vector.extract_strided_slice %70 {offsets = [0, 96], sizes = [1, 32], strides = [1, 1]} : vector<1x128xf32> to vector<1x32xf32>
    %86 = arith.negf %85 : vector<1x32xf32>
    %87 = math.exp %86 : vector<1x32xf32>
    %cst_30 = arith.constant 1.000000e+00 : f32
    %88 = vector.broadcast %cst_30 : f32 to vector<1x32xf32>
    %89 = arith.addf %88, %87 : vector<1x32xf32>
    %90 = arith.divf %88, %89 : vector<1x32xf32>
    %91 = arith.mulf %82, %64 : vector<1x32xf32>
    %92 = arith.mulf %76, %84 : vector<1x32xf32>
    %93 = arith.addf %91, %92 : vector<1x32xf32>
    %94 = math.tanh %93 : vector<1x32xf32>
    %95 = arith.mulf %90, %94 : vector<1x32xf32>
    %c2_31 = arith.constant 2 : index
    %c0_32 = arith.constant 0 : index
    %96 = vector.load %arg11[%c2_31, %c0_32] : memref<8x32xf32, #tpu.memory_space<vmem>>, vector<1x32xf32>
    tpu.vector_store %arg11[%c2_31, %c0_32], %95 {strides = array<i32>} : memref<8x32xf32, #tpu.memory_space<vmem>>, vector<1x32xf32>,
    %c3 = arith.constant 3 : index
    %c0_33 = arith.constant 0 : index
    %97 = vector.load %arg12[%c3, %c0_33] : memref<8x128xf32, #tpu.memory_space<vmem>>, vector<1x128xf32>
    %cst_34 = arith.constant dense<0.000000e+00> : vector<1x128xf32>
    %98 = tpu.matmul %95, %7, %cst_34 {dimension_numbers = #tpu.dot_dimension_numbers<[1], [0], [0], [1], [0, 0, 1, 1], [], []>} : vector<1x32xf32>, vector<32x128xf32>, vector<1x128xf32> -> vector<1x128xf32>
    %99 = arith.addf %97, %98 : vector<1x128xf32>
    %100 = vector.extract_strided_slice %99 {offsets = [0, 0], sizes = [1, 32], strides = [1, 1]} : vector<1x128xf32> to vector<1x32xf32>
    %101 = arith.negf %100 : vector<1x32xf32>
    %102 = math.exp %101 : vector<1x32xf32>
    %cst_35 = arith.constant 1.000000e+00 : f32
    %103 = vector.broadcast %cst_35 : f32 to vector<1x32xf32>
    %104 = arith.addf %103, %102 : vector<1x32xf32>
    %105 = arith.divf %103, %104 : vector<1x32xf32>
    %106 = vector.extract_strided_slice %99 {offsets = [0, 32], sizes = [1, 32], strides = [1, 1]} : vector<1x128xf32> to vector<1x32xf32>
    %107 = arith.negf %106 : vector<1x32xf32>
    %108 = math.exp %107 : vector<1x32xf32>
    %cst_36 = arith.constant 1.000000e+00 : f32
    %109 = vector.broadcast %cst_36 : f32 to vector<1x32xf32>
    %110 = arith.addf %109, %108 : vector<1x32xf32>
    %111 = arith.divf %109, %110 : vector<1x32xf32>
    %112 = vector.extract_strided_slice %99 {offsets = [0, 64], sizes = [1, 32], strides = [1, 1]} : vector<1x128xf32> to vector<1x32xf32>
    %113 = math.tanh %112 : vector<1x32xf32>
    %114 = vector.extract_strided_slice %99 {offsets = [0, 96], sizes = [1, 32], strides = [1, 1]} : vector<1x128xf32> to vector<1x32xf32>
    %115 = arith.negf %114 : vector<1x32xf32>
    %116 = math.exp %115 : vector<1x32xf32>
    %cst_37 = arith.constant 1.000000e+00 : f32
    %117 = vector.broadcast %cst_37 : f32 to vector<1x32xf32>
    %118 = arith.addf %117, %116 : vector<1x32xf32>
    %119 = arith.divf %117, %118 : vector<1x32xf32>
    %120 = arith.mulf %111, %93 : vector<1x32xf32>
    %121 = arith.mulf %105, %113 : vector<1x32xf32>
    %122 = arith.addf %120, %121 : vector<1x32xf32>
    %123 = math.tanh %122 : vector<1x32xf32>
    %124 = arith.mulf %119, %123 : vector<1x32xf32>
    %c3_38 = arith.constant 3 : index
    %c0_39 = arith.constant 0 : index
    %125 = vector.load %arg11[%c3_38, %c0_39] : memref<8x32xf32, #tpu.memory_space<vmem>>, vector<1x32xf32>
    tpu.vector_store %arg11[%c3_38, %c0_39], %124 {strides = array<i32>} : memref<8x32xf32, #tpu.memory_space<vmem>>, vector<1x32xf32>,
    %c4 = arith.constant 4 : index
    %c0_40 = arith.constant 0 : index
    %126 = vector.load %arg12[%c4, %c0_40] : memref<8x128xf32, #tpu.memory_space<vmem>>, vector<1x128xf32>
    %cst_41 = arith.constant dense<0.000000e+00> : vector<1x128xf32>
    %127 = tpu.matmul %124, %7, %cst_41 {dimension_numbers = #tpu.dot_dimension_numbers<[1], [0], [0], [1], [0, 0, 1, 1], [], []>} : vector<1x32xf32>, vector<32x128xf32>, vector<1x128xf32> -> vector<1x128xf32>
    %128 = arith.addf %126, %127 : vector<1x128xf32>
    %129 = vector.extract_strided_slice %128 {offsets = [0, 0], sizes = [1, 32], strides = [1, 1]} : vector<1x128xf32> to vector<1x32xf32>
    %130 = arith.negf %129 : vector<1x32xf32>
    %131 = math.exp %130 : vector<1x32xf32>
    %cst_42 = arith.constant 1.000000e+00 : f32
    %132 = vector.broadcast %cst_42 : f32 to vector<1x32xf32>
    %133 = arith.addf %132, %131 : vector<1x32xf32>
    %134 = arith.divf %132, %133 : vector<1x32xf32>
    %135 = vector.extract_strided_slice %128 {offsets = [0, 32], sizes = [1, 32], strides = [1, 1]} : vector<1x128xf32> to vector<1x32xf32>
    %136 = arith.negf %135 : vector<1x32xf32>
    %137 = math.exp %136 : vector<1x32xf32>
    %cst_43 = arith.constant 1.000000e+00 : f32
    %138 = vector.broadcast %cst_43 : f32 to vector<1x32xf32>
    %139 = arith.addf %138, %137 : vector<1x32xf32>
    %140 = arith.divf %138, %139 : vector<1x32xf32>
    %141 = vector.extract_strided_slice %128 {offsets = [0, 64], sizes = [1, 32], strides = [1, 1]} : vector<1x128xf32> to vector<1x32xf32>
    %142 = math.tanh %141 : vector<1x32xf32>
    %143 = vector.extract_strided_slice %128 {offsets = [0, 96], sizes = [1, 32], strides = [1, 1]} : vector<1x128xf32> to vector<1x32xf32>
    %144 = arith.negf %143 : vector<1x32xf32>
    %145 = math.exp %144 : vector<1x32xf32>
    %cst_44 = arith.constant 1.000000e+00 : f32
    %146 = vector.broadcast %cst_44 : f32 to vector<1x32xf32>
    %147 = arith.addf %146, %145 : vector<1x32xf32>
    %148 = arith.divf %146, %147 : vector<1x32xf32>
    %149 = arith.mulf %140, %122 : vector<1x32xf32>
    %150 = arith.mulf %134, %142 : vector<1x32xf32>
    %151 = arith.addf %149, %150 : vector<1x32xf32>
    %152 = math.tanh %151 : vector<1x32xf32>
    %153 = arith.mulf %148, %152 : vector<1x32xf32>
    %c4_45 = arith.constant 4 : index
    %c0_46 = arith.constant 0 : index
    %154 = vector.load %arg11[%c4_45, %c0_46] : memref<8x32xf32, #tpu.memory_space<vmem>>, vector<1x32xf32>
    tpu.vector_store %arg11[%c4_45, %c0_46], %153 {strides = array<i32>} : memref<8x32xf32, #tpu.memory_space<vmem>>, vector<1x32xf32>,
    %c5 = arith.constant 5 : index
    %c0_47 = arith.constant 0 : index
    %155 = vector.load %arg12[%c5, %c0_47] : memref<8x128xf32, #tpu.memory_space<vmem>>, vector<1x128xf32>
    %cst_48 = arith.constant dense<0.000000e+00> : vector<1x128xf32>
    %156 = tpu.matmul %153, %7, %cst_48 {dimension_numbers = #tpu.dot_dimension_numbers<[1], [0], [0], [1], [0, 0, 1, 1], [], []>} : vector<1x32xf32>, vector<32x128xf32>, vector<1x128xf32> -> vector<1x128xf32>
    %157 = arith.addf %155, %156 : vector<1x128xf32>
    %158 = vector.extract_strided_slice %157 {offsets = [0, 0], sizes = [1, 32], strides = [1, 1]} : vector<1x128xf32> to vector<1x32xf32>
    %159 = arith.negf %158 : vector<1x32xf32>
    %160 = math.exp %159 : vector<1x32xf32>
    %cst_49 = arith.constant 1.000000e+00 : f32
    %161 = vector.broadcast %cst_49 : f32 to vector<1x32xf32>
    %162 = arith.addf %161, %160 : vector<1x32xf32>
    %163 = arith.divf %161, %162 : vector<1x32xf32>
    %164 = vector.extract_strided_slice %157 {offsets = [0, 32], sizes = [1, 32], strides = [1, 1]} : vector<1x128xf32> to vector<1x32xf32>
    %165 = arith.negf %164 : vector<1x32xf32>
    %166 = math.exp %165 : vector<1x32xf32>
    %cst_50 = arith.constant 1.000000e+00 : f32
    %167 = vector.broadcast %cst_50 : f32 to vector<1x32xf32>
    %168 = arith.addf %167, %166 : vector<1x32xf32>
    %169 = arith.divf %167, %168 : vector<1x32xf32>
    %170 = vector.extract_strided_slice %157 {offsets = [0, 64], sizes = [1, 32], strides = [1, 1]} : vector<1x128xf32> to vector<1x32xf32>
    %171 = math.tanh %170 : vector<1x32xf32>
    %172 = vector.extract_strided_slice %157 {offsets = [0, 96], sizes = [1, 32], strides = [1, 1]} : vector<1x128xf32> to vector<1x32xf32>
    %173 = arith.negf %172 : vector<1x32xf32>
    %174 = math.exp %173 : vector<1x32xf32>
    %cst_51 = arith.constant 1.000000e+00 : f32
    %175 = vector.broadcast %cst_51 : f32 to vector<1x32xf32>
    %176 = arith.addf %175, %174 : vector<1x32xf32>
    %177 = arith.divf %175, %176 : vector<1x32xf32>
    %178 = arith.mulf %169, %151 : vector<1x32xf32>
    %179 = arith.mulf %163, %171 : vector<1x32xf32>
    %180 = arith.addf %178, %179 : vector<1x32xf32>
    %181 = math.tanh %180 : vector<1x32xf32>
    %182 = arith.mulf %177, %181 : vector<1x32xf32>
    %c5_52 = arith.constant 5 : index
    %c0_53 = arith.constant 0 : index
    %183 = vector.load %arg11[%c5_52, %c0_53] : memref<8x32xf32, #tpu.memory_space<vmem>>, vector<1x32xf32>
    tpu.vector_store %arg11[%c5_52, %c0_53], %182 {strides = array<i32>} : memref<8x32xf32, #tpu.memory_space<vmem>>, vector<1x32xf32>,
    %c6 = arith.constant 6 : index
    %c0_54 = arith.constant 0 : index
    %184 = vector.load %arg12[%c6, %c0_54] : memref<8x128xf32, #tpu.memory_space<vmem>>, vector<1x128xf32>
    %cst_55 = arith.constant dense<0.000000e+00> : vector<1x128xf32>
    %185 = tpu.matmul %182, %7, %cst_55 {dimension_numbers = #tpu.dot_dimension_numbers<[1], [0], [0], [1], [0, 0, 1, 1], [], []>} : vector<1x32xf32>, vector<32x128xf32>, vector<1x128xf32> -> vector<1x128xf32>
    %186 = arith.addf %184, %185 : vector<1x128xf32>
    %187 = vector.extract_strided_slice %186 {offsets = [0, 0], sizes = [1, 32], strides = [1, 1]} : vector<1x128xf32> to vector<1x32xf32>
    %188 = arith.negf %187 : vector<1x32xf32>
    %189 = math.exp %188 : vector<1x32xf32>
    %cst_56 = arith.constant 1.000000e+00 : f32
    %190 = vector.broadcast %cst_56 : f32 to vector<1x32xf32>
    %191 = arith.addf %190, %189 : vector<1x32xf32>
    %192 = arith.divf %190, %191 : vector<1x32xf32>
    %193 = vector.extract_strided_slice %186 {offsets = [0, 32], sizes = [1, 32], strides = [1, 1]} : vector<1x128xf32> to vector<1x32xf32>
    %194 = arith.negf %193 : vector<1x32xf32>
    %195 = math.exp %194 : vector<1x32xf32>
    %cst_57 = arith.constant 1.000000e+00 : f32
    %196 = vector.broadcast %cst_57 : f32 to vector<1x32xf32>
    %197 = arith.addf %196, %195 : vector<1x32xf32>
    %198 = arith.divf %196, %197 : vector<1x32xf32>
    %199 = vector.extract_strided_slice %186 {offsets = [0, 64], sizes = [1, 32], strides = [1, 1]} : vector<1x128xf32> to vector<1x32xf32>
    %200 = math.tanh %199 : vector<1x32xf32>
    %201 = vector.extract_strided_slice %186 {offsets = [0, 96], sizes = [1, 32], strides = [1, 1]} : vector<1x128xf32> to vector<1x32xf32>
    %202 = arith.negf %201 : vector<1x32xf32>
    %203 = math.exp %202 : vector<1x32xf32>
    %cst_58 = arith.constant 1.000000e+00 : f32
    %204 = vector.broadcast %cst_58 : f32 to vector<1x32xf32>
    %205 = arith.addf %204, %203 : vector<1x32xf32>
    %206 = arith.divf %204, %205 : vector<1x32xf32>
    %207 = arith.mulf %198, %180 : vector<1x32xf32>
    %208 = arith.mulf %192, %200 : vector<1x32xf32>
    %209 = arith.addf %207, %208 : vector<1x32xf32>
    %210 = math.tanh %209 : vector<1x32xf32>
    %211 = arith.mulf %206, %210 : vector<1x32xf32>
    %c6_59 = arith.constant 6 : index
    %c0_60 = arith.constant 0 : index
    %212 = vector.load %arg11[%c6_59, %c0_60] : memref<8x32xf32, #tpu.memory_space<vmem>>, vector<1x32xf32>
    tpu.vector_store %arg11[%c6_59, %c0_60], %211 {strides = array<i32>} : memref<8x32xf32, #tpu.memory_space<vmem>>, vector<1x32xf32>,
    %c7 = arith.constant 7 : index
    %c0_61 = arith.constant 0 : index
    %213 = vector.load %arg12[%c7, %c0_61] : memref<8x128xf32, #tpu.memory_space<vmem>>, vector<1x128xf32>
    %cst_62 = arith.constant dense<0.000000e+00> : vector<1x128xf32>
    %214 = tpu.matmul %211, %7, %cst_62 {dimension_numbers = #tpu.dot_dimension_numbers<[1], [0], [0], [1], [0, 0, 1, 1], [], []>} : vector<1x32xf32>, vector<32x128xf32>, vector<1x128xf32> -> vector<1x128xf32>
    %215 = arith.addf %213, %214 : vector<1x128xf32>
    %216 = vector.extract_strided_slice %215 {offsets = [0, 0], sizes = [1, 32], strides = [1, 1]} : vector<1x128xf32> to vector<1x32xf32>
    %217 = arith.negf %216 : vector<1x32xf32>
    %218 = math.exp %217 : vector<1x32xf32>
    %cst_63 = arith.constant 1.000000e+00 : f32
    %219 = vector.broadcast %cst_63 : f32 to vector<1x32xf32>
    %220 = arith.addf %219, %218 : vector<1x32xf32>
    %221 = arith.divf %219, %220 : vector<1x32xf32>
    %222 = vector.extract_strided_slice %215 {offsets = [0, 32], sizes = [1, 32], strides = [1, 1]} : vector<1x128xf32> to vector<1x32xf32>
    %223 = arith.negf %222 : vector<1x32xf32>
    %224 = math.exp %223 : vector<1x32xf32>
    %cst_64 = arith.constant 1.000000e+00 : f32
    %225 = vector.broadcast %cst_64 : f32 to vector<1x32xf32>
    %226 = arith.addf %225, %224 : vector<1x32xf32>
    %227 = arith.divf %225, %226 : vector<1x32xf32>
    %228 = vector.extract_strided_slice %215 {offsets = [0, 64], sizes = [1, 32], strides = [1, 1]} : vector<1x128xf32> to vector<1x32xf32>
    %229 = math.tanh %228 : vector<1x32xf32>
    %230 = vector.extract_strided_slice %215 {offsets = [0, 96], sizes = [1, 32], strides = [1, 1]} : vector<1x128xf32> to vector<1x32xf32>
    %231 = arith.negf %230 : vector<1x32xf32>
    %232 = math.exp %231 : vector<1x32xf32>
    %cst_65 = arith.constant 1.000000e+00 : f32
    %233 = vector.broadcast %cst_65 : f32 to vector<1x32xf32>
    %234 = arith.addf %233, %232 : vector<1x32xf32>
    %235 = arith.divf %233, %234 : vector<1x32xf32>
    %236 = arith.mulf %227, %209 : vector<1x32xf32>
    %237 = arith.mulf %221, %229 : vector<1x32xf32>
    %238 = arith.addf %236, %237 : vector<1x32xf32>
    %239 = math.tanh %238 : vector<1x32xf32>
    %240 = arith.mulf %235, %239 : vector<1x32xf32>
    %c7_66 = arith.constant 7 : index
    %c0_67 = arith.constant 0 : index
    %241 = vector.load %arg11[%c7_66, %c0_67] : memref<8x32xf32, #tpu.memory_space<vmem>>, vector<1x32xf32>
    tpu.vector_store %arg11[%c7_66, %c0_67], %240 {strides = array<i32>} : memref<8x32xf32, #tpu.memory_space<vmem>>, vector<1x32xf32>,
    %c0_68 = arith.constant 0 : index
    %c0_69 = arith.constant 0 : index
    %242 = vector.load %arg11[%c0_68, %c0_69] : memref<8x32xf32, #tpu.memory_space<vmem>>, vector<8x32xf32>
    %c0_70 = arith.constant 0 : index
    %c0_71 = arith.constant 0 : index
    %243 = vector.load %arg5[%c0_70, %c0_71] : memref<32x128xf32, #tpu.memory_space<vmem>>, vector<32x128xf32>
    %cst_72 = arith.constant dense<0.000000e+00> : vector<8x128xf32>
    %244 = tpu.matmul %242, %243, %cst_72 {dimension_numbers = #tpu.dot_dimension_numbers<[1], [0], [0], [1], [0, 0, 1, 1], [], []>} : vector<8x32xf32>, vector<32x128xf32>, vector<8x128xf32> -> vector<8x128xf32>
    %c0_73 = arith.constant 0 : index
    %c0_74 = arith.constant 0 : index
    %245 = vector.load %arg7[%c0_73, %c0_74] : memref<1x128xf32, #tpu.memory_space<vmem>>, vector<1x128xf32>
    %246 = vector.broadcast %245 : vector<1x128xf32> to vector<8x128xf32>
    %247 = arith.addf %244, %246 : vector<8x128xf32>
    %c0_75 = arith.constant 0 : index
    %c0_76 = arith.constant 0 : index
    %248 = vector.load %arg12[%c0_75, %c0_76] : memref<8x128xf32, #tpu.memory_space<vmem>>, vector<8x128xf32>
    tpu.vector_store %arg12[%c0_75, %c0_76], %247 {strides = array<i32>} : memref<8x128xf32, #tpu.memory_space<vmem>>, vector<8x128xf32>,
    %c0_77 = arith.constant 0 : index
    %c0_78 = arith.constant 0 : index
    %249 = vector.load %arg6[%c0_77, %c0_78] : memref<32x128xf32, #tpu.memory_space<vmem>>, vector<32x128xf32>
    %cst_79 = arith.constant 0.000000e+00 : f32
    %250 = vector.broadcast %cst_79 : f32 to vector<1x32xf32>
    %cst_80 = arith.constant 0.000000e+00 : f32
    %251 = vector.broadcast %cst_80 : f32 to vector<1x32xf32>
    %c0_81 = arith.constant 0 : index
    %c0_82 = arith.constant 0 : index
    %252 = vector.load %arg12[%c0_81, %c0_82] : memref<8x128xf32, #tpu.memory_space<vmem>>, vector<1x128xf32>
    %cst_83 = arith.constant dense<0.000000e+00> : vector<1x128xf32>
    %253 = tpu.matmul %250, %249, %cst_83 {dimension_numbers = #tpu.dot_dimension_numbers<[1], [0], [0], [1], [0, 0, 1, 1], [], []>} : vector<1x32xf32>, vector<32x128xf32>, vector<1x128xf32> -> vector<1x128xf32>
    %254 = arith.addf %252, %253 : vector<1x128xf32>
    %255 = vector.extract_strided_slice %254 {offsets = [0, 0], sizes = [1, 32], strides = [1, 1]} : vector<1x128xf32> to vector<1x32xf32>
    %256 = arith.negf %255 : vector<1x32xf32>
    %257 = math.exp %256 : vector<1x32xf32>
    %cst_84 = arith.constant 1.000000e+00 : f32
    %258 = vector.broadcast %cst_84 : f32 to vector<1x32xf32>
    %259 = arith.addf %258, %257 : vector<1x32xf32>
    %260 = arith.divf %258, %259 : vector<1x32xf32>
    %261 = vector.extract_strided_slice %254 {offsets = [0, 32], sizes = [1, 32], strides = [1, 1]} : vector<1x128xf32> to vector<1x32xf32>
    %262 = arith.negf %261 : vector<1x32xf32>
    %263 = math.exp %262 : vector<1x32xf32>
    %cst_85 = arith.constant 1.000000e+00 : f32
    %264 = vector.broadcast %cst_85 : f32 to vector<1x32xf32>
    %265 = arith.addf %264, %263 : vector<1x32xf32>
    %266 = arith.divf %264, %265 : vector<1x32xf32>
    %267 = vector.extract_strided_slice %254 {offsets = [0, 64], sizes = [1, 32], strides = [1, 1]} : vector<1x128xf32> to vector<1x32xf32>
    %268 = math.tanh %267 : vector<1x32xf32>
    %269 = vector.extract_strided_slice %254 {offsets = [0, 96], sizes = [1, 32], strides = [1, 1]} : vector<1x128xf32> to vector<1x32xf32>
    %270 = arith.negf %269 : vector<1x32xf32>
    %271 = math.exp %270 : vector<1x32xf32>
    %cst_86 = arith.constant 1.000000e+00 : f32
    %272 = vector.broadcast %cst_86 : f32 to vector<1x32xf32>
    %273 = arith.addf %272, %271 : vector<1x32xf32>
    %274 = arith.divf %272, %273 : vector<1x32xf32>
    %275 = arith.mulf %266, %251 : vector<1x32xf32>
    %276 = arith.mulf %260, %268 : vector<1x32xf32>
    %277 = arith.addf %275, %276 : vector<1x32xf32>
    %278 = math.tanh %277 : vector<1x32xf32>
    %279 = arith.mulf %274, %278 : vector<1x32xf32>
    %c0_87 = arith.constant 0 : index
    %c0_88 = arith.constant 0 : index
    %280 = vector.load %arg11[%c0_87, %c0_88] : memref<8x32xf32, #tpu.memory_space<vmem>>, vector<1x32xf32>
    tpu.vector_store %arg11[%c0_87, %c0_88], %279 {strides = array<i32>} : memref<8x32xf32, #tpu.memory_space<vmem>>, vector<1x32xf32>,
    %c1_89 = arith.constant 1 : index
    %c0_90 = arith.constant 0 : index
    %281 = vector.load %arg12[%c1_89, %c0_90] : memref<8x128xf32, #tpu.memory_space<vmem>>, vector<1x128xf32>
    %cst_91 = arith.constant dense<0.000000e+00> : vector<1x128xf32>
    %282 = tpu.matmul %279, %249, %cst_91 {dimension_numbers = #tpu.dot_dimension_numbers<[1], [0], [0], [1], [0, 0, 1, 1], [], []>} : vector<1x32xf32>, vector<32x128xf32>, vector<1x128xf32> -> vector<1x128xf32>
    %283 = arith.addf %281, %282 : vector<1x128xf32>
    %284 = vector.extract_strided_slice %283 {offsets = [0, 0], sizes = [1, 32], strides = [1, 1]} : vector<1x128xf32> to vector<1x32xf32>
    %285 = arith.negf %284 : vector<1x32xf32>
    %286 = math.exp %285 : vector<1x32xf32>
    %cst_92 = arith.constant 1.000000e+00 : f32
    %287 = vector.broadcast %cst_92 : f32 to vector<1x32xf32>
    %288 = arith.addf %287, %286 : vector<1x32xf32>
    %289 = arith.divf %287, %288 : vector<1x32xf32>
    %290 = vector.extract_strided_slice %283 {offsets = [0, 32], sizes = [1, 32], strides = [1, 1]} : vector<1x128xf32> to vector<1x32xf32>
    %291 = arith.negf %290 : vector<1x32xf32>
    %292 = math.exp %291 : vector<1x32xf32>
    %cst_93 = arith.constant 1.000000e+00 : f32
    %293 = vector.broadcast %cst_93 : f32 to vector<1x32xf32>
    %294 = arith.addf %293, %292 : vector<1x32xf32>
    %295 = arith.divf %293, %294 : vector<1x32xf32>
    %296 = vector.extract_strided_slice %283 {offsets = [0, 64], sizes = [1, 32], strides = [1, 1]} : vector<1x128xf32> to vector<1x32xf32>
    %297 = math.tanh %296 : vector<1x32xf32>
    %298 = vector.extract_strided_slice %283 {offsets = [0, 96], sizes = [1, 32], strides = [1, 1]} : vector<1x128xf32> to vector<1x32xf32>
    %299 = arith.negf %298 : vector<1x32xf32>
    %300 = math.exp %299 : vector<1x32xf32>
    %cst_94 = arith.constant 1.000000e+00 : f32
    %301 = vector.broadcast %cst_94 : f32 to vector<1x32xf32>
    %302 = arith.addf %301, %300 : vector<1x32xf32>
    %303 = arith.divf %301, %302 : vector<1x32xf32>
    %304 = arith.mulf %295, %277 : vector<1x32xf32>
    %305 = arith.mulf %289, %297 : vector<1x32xf32>
    %306 = arith.addf %304, %305 : vector<1x32xf32>
    %307 = math.tanh %306 : vector<1x32xf32>
    %308 = arith.mulf %303, %307 : vector<1x32xf32>
    %c1_95 = arith.constant 1 : index
    %c0_96 = arith.constant 0 : index
    %309 = vector.load %arg11[%c1_95, %c0_96] : memref<8x32xf32, #tpu.memory_space<vmem>>, vector<1x32xf32>
    tpu.vector_store %arg11[%c1_95, %c0_96], %308 {strides = array<i32>} : memref<8x32xf32, #tpu.memory_space<vmem>>, vector<1x32xf32>,
    %c2_97 = arith.constant 2 : index
    %c0_98 = arith.constant 0 : index
    %310 = vector.load %arg12[%c2_97, %c0_98] : memref<8x128xf32, #tpu.memory_space<vmem>>, vector<1x128xf32>
    %cst_99 = arith.constant dense<0.000000e+00> : vector<1x128xf32>
    %311 = tpu.matmul %308, %249, %cst_99 {dimension_numbers = #tpu.dot_dimension_numbers<[1], [0], [0], [1], [0, 0, 1, 1], [], []>} : vector<1x32xf32>, vector<32x128xf32>, vector<1x128xf32> -> vector<1x128xf32>
    %312 = arith.addf %310, %311 : vector<1x128xf32>
    %313 = vector.extract_strided_slice %312 {offsets = [0, 0], sizes = [1, 32], strides = [1, 1]} : vector<1x128xf32> to vector<1x32xf32>
    %314 = arith.negf %313 : vector<1x32xf32>
    %315 = math.exp %314 : vector<1x32xf32>
    %cst_100 = arith.constant 1.000000e+00 : f32
    %316 = vector.broadcast %cst_100 : f32 to vector<1x32xf32>
    %317 = arith.addf %316, %315 : vector<1x32xf32>
    %318 = arith.divf %316, %317 : vector<1x32xf32>
    %319 = vector.extract_strided_slice %312 {offsets = [0, 32], sizes = [1, 32], strides = [1, 1]} : vector<1x128xf32> to vector<1x32xf32>
    %320 = arith.negf %319 : vector<1x32xf32>
    %321 = math.exp %320 : vector<1x32xf32>
    %cst_101 = arith.constant 1.000000e+00 : f32
    %322 = vector.broadcast %cst_101 : f32 to vector<1x32xf32>
    %323 = arith.addf %322, %321 : vector<1x32xf32>
    %324 = arith.divf %322, %323 : vector<1x32xf32>
    %325 = vector.extract_strided_slice %312 {offsets = [0, 64], sizes = [1, 32], strides = [1, 1]} : vector<1x128xf32> to vector<1x32xf32>
    %326 = math.tanh %325 : vector<1x32xf32>
    %327 = vector.extract_strided_slice %312 {offsets = [0, 96], sizes = [1, 32], strides = [1, 1]} : vector<1x128xf32> to vector<1x32xf32>
    %328 = arith.negf %327 : vector<1x32xf32>
    %329 = math.exp %328 : vector<1x32xf32>
    %cst_102 = arith.constant 1.000000e+00 : f32
    %330 = vector.broadcast %cst_102 : f32 to vector<1x32xf32>
    %331 = arith.addf %330, %329 : vector<1x32xf32>
    %332 = arith.divf %330, %331 : vector<1x32xf32>
    %333 = arith.mulf %324, %306 : vector<1x32xf32>
    %334 = arith.mulf %318, %326 : vector<1x32xf32>
    %335 = arith.addf %333, %334 : vector<1x32xf32>
    %336 = math.tanh %335 : vector<1x32xf32>
    %337 = arith.mulf %332, %336 : vector<1x32xf32>
    %c2_103 = arith.constant 2 : index
    %c0_104 = arith.constant 0 : index
    %338 = vector.load %arg11[%c2_103, %c0_104] : memref<8x32xf32, #tpu.memory_space<vmem>>, vector<1x32xf32>
    tpu.vector_store %arg11[%c2_103, %c0_104], %337 {strides = array<i32>} : memref<8x32xf32, #tpu.memory_space<vmem>>, vector<1x32xf32>,
    %c3_105 = arith.constant 3 : index
    %c0_106 = arith.constant 0 : index
    %339 = vector.load %arg12[%c3_105, %c0_106] : memref<8x128xf32, #tpu.memory_space<vmem>>, vector<1x128xf32>
    %cst_107 = arith.constant dense<0.000000e+00> : vector<1x128xf32>
    %340 = tpu.matmul %337, %249, %cst_107 {dimension_numbers = #tpu.dot_dimension_numbers<[1], [0], [0], [1], [0, 0, 1, 1], [], []>} : vector<1x32xf32>, vector<32x128xf32>, vector<1x128xf32> -> vector<1x128xf32>
    %341 = arith.addf %339, %340 : vector<1x128xf32>
    %342 = vector.extract_strided_slice %341 {offsets = [0, 0], sizes = [1, 32], strides = [1, 1]} : vector<1x128xf32> to vector<1x32xf32>
    %343 = arith.negf %342 : vector<1x32xf32>
    %344 = math.exp %343 : vector<1x32xf32>
    %cst_108 = arith.constant 1.000000e+00 : f32
    %345 = vector.broadcast %cst_108 : f32 to vector<1x32xf32>
    %346 = arith.addf %345, %344 : vector<1x32xf32>
    %347 = arith.divf %345, %346 : vector<1x32xf32>
    %348 = vector.extract_strided_slice %341 {offsets = [0, 32], sizes = [1, 32], strides = [1, 1]} : vector<1x128xf32> to vector<1x32xf32>
    %349 = arith.negf %348 : vector<1x32xf32>
    %350 = math.exp %349 : vector<1x32xf32>
    %cst_109 = arith.constant 1.000000e+00 : f32
    %351 = vector.broadcast %cst_109 : f32 to vector<1x32xf32>
    %352 = arith.addf %351, %350 : vector<1x32xf32>
    %353 = arith.divf %351, %352 : vector<1x32xf32>
    %354 = vector.extract_strided_slice %341 {offsets = [0, 64], sizes = [1, 32], strides = [1, 1]} : vector<1x128xf32> to vector<1x32xf32>
    %355 = math.tanh %354 : vector<1x32xf32>
    %356 = vector.extract_strided_slice %341 {offsets = [0, 96], sizes = [1, 32], strides = [1, 1]} : vector<1x128xf32> to vector<1x32xf32>
    %357 = arith.negf %356 : vector<1x32xf32>
    %358 = math.exp %357 : vector<1x32xf32>
    %cst_110 = arith.constant 1.000000e+00 : f32
    %359 = vector.broadcast %cst_110 : f32 to vector<1x32xf32>
    %360 = arith.addf %359, %358 : vector<1x32xf32>
    %361 = arith.divf %359, %360 : vector<1x32xf32>
    %362 = arith.mulf %353, %335 : vector<1x32xf32>
    %363 = arith.mulf %347, %355 : vector<1x32xf32>
    %364 = arith.addf %362, %363 : vector<1x32xf32>
    %365 = math.tanh %364 : vector<1x32xf32>
    %366 = arith.mulf %361, %365 : vector<1x32xf32>
    %c3_111 = arith.constant 3 : index
    %c0_112 = arith.constant 0 : index
    %367 = vector.load %arg11[%c3_111, %c0_112] : memref<8x32xf32, #tpu.memory_space<vmem>>, vector<1x32xf32>
    tpu.vector_store %arg11[%c3_111, %c0_112], %366 {strides = array<i32>} : memref<8x32xf32, #tpu.memory_space<vmem>>, vector<1x32xf32>,
    %c4_113 = arith.constant 4 : index
    %c0_114 = arith.constant 0 : index
    %368 = vector.load %arg12[%c4_113, %c0_114] : memref<8x128xf32, #tpu.memory_space<vmem>>, vector<1x128xf32>
    %cst_115 = arith.constant dense<0.000000e+00> : vector<1x128xf32>
    %369 = tpu.matmul %366, %249, %cst_115 {dimension_numbers = #tpu.dot_dimension_numbers<[1], [0], [0], [1], [0, 0, 1, 1], [], []>} : vector<1x32xf32>, vector<32x128xf32>, vector<1x128xf32> -> vector<1x128xf32>
    %370 = arith.addf %368, %369 : vector<1x128xf32>
    %371 = vector.extract_strided_slice %370 {offsets = [0, 0], sizes = [1, 32], strides = [1, 1]} : vector<1x128xf32> to vector<1x32xf32>
    %372 = arith.negf %371 : vector<1x32xf32>
    %373 = math.exp %372 : vector<1x32xf32>
    %cst_116 = arith.constant 1.000000e+00 : f32
    %374 = vector.broadcast %cst_116 : f32 to vector<1x32xf32>
    %375 = arith.addf %374, %373 : vector<1x32xf32>
    %376 = arith.divf %374, %375 : vector<1x32xf32>
    %377 = vector.extract_strided_slice %370 {offsets = [0, 32], sizes = [1, 32], strides = [1, 1]} : vector<1x128xf32> to vector<1x32xf32>
    %378 = arith.negf %377 : vector<1x32xf32>
    %379 = math.exp %378 : vector<1x32xf32>
    %cst_117 = arith.constant 1.000000e+00 : f32
    %380 = vector.broadcast %cst_117 : f32 to vector<1x32xf32>
    %381 = arith.addf %380, %379 : vector<1x32xf32>
    %382 = arith.divf %380, %381 : vector<1x32xf32>
    %383 = vector.extract_strided_slice %370 {offsets = [0, 64], sizes = [1, 32], strides = [1, 1]} : vector<1x128xf32> to vector<1x32xf32>
    %384 = math.tanh %383 : vector<1x32xf32>
    %385 = vector.extract_strided_slice %370 {offsets = [0, 96], sizes = [1, 32], strides = [1, 1]} : vector<1x128xf32> to vector<1x32xf32>
    %386 = arith.negf %385 : vector<1x32xf32>
    %387 = math.exp %386 : vector<1x32xf32>
    %cst_118 = arith.constant 1.000000e+00 : f32
    %388 = vector.broadcast %cst_118 : f32 to vector<1x32xf32>
    %389 = arith.addf %388, %387 : vector<1x32xf32>
    %390 = arith.divf %388, %389 : vector<1x32xf32>
    %391 = arith.mulf %382, %364 : vector<1x32xf32>
    %392 = arith.mulf %376, %384 : vector<1x32xf32>
    %393 = arith.addf %391, %392 : vector<1x32xf32>
    %394 = math.tanh %393 : vector<1x32xf32>
    %395 = arith.mulf %390, %394 : vector<1x32xf32>
    %c4_119 = arith.constant 4 : index
    %c0_120 = arith.constant 0 : index
    %396 = vector.load %arg11[%c4_119, %c0_120] : memref<8x32xf32, #tpu.memory_space<vmem>>, vector<1x32xf32>
    tpu.vector_store %arg11[%c4_119, %c0_120], %395 {strides = array<i32>} : memref<8x32xf32, #tpu.memory_space<vmem>>, vector<1x32xf32>,
    %c5_121 = arith.constant 5 : index
    %c0_122 = arith.constant 0 : index
    %397 = vector.load %arg12[%c5_121, %c0_122] : memref<8x128xf32, #tpu.memory_space<vmem>>, vector<1x128xf32>
    %cst_123 = arith.constant dense<0.000000e+00> : vector<1x128xf32>
    %398 = tpu.matmul %395, %249, %cst_123 {dimension_numbers = #tpu.dot_dimension_numbers<[1], [0], [0], [1], [0, 0, 1, 1], [], []>} : vector<1x32xf32>, vector<32x128xf32>, vector<1x128xf32> -> vector<1x128xf32>
    %399 = arith.addf %397, %398 : vector<1x128xf32>
    %400 = vector.extract_strided_slice %399 {offsets = [0, 0], sizes = [1, 32], strides = [1, 1]} : vector<1x128xf32> to vector<1x32xf32>
    %401 = arith.negf %400 : vector<1x32xf32>
    %402 = math.exp %401 : vector<1x32xf32>
    %cst_124 = arith.constant 1.000000e+00 : f32
    %403 = vector.broadcast %cst_124 : f32 to vector<1x32xf32>
    %404 = arith.addf %403, %402 : vector<1x32xf32>
    %405 = arith.divf %403, %404 : vector<1x32xf32>
    %406 = vector.extract_strided_slice %399 {offsets = [0, 32], sizes = [1, 32], strides = [1, 1]} : vector<1x128xf32> to vector<1x32xf32>
    %407 = arith.negf %406 : vector<1x32xf32>
    %408 = math.exp %407 : vector<1x32xf32>
    %cst_125 = arith.constant 1.000000e+00 : f32
    %409 = vector.broadcast %cst_125 : f32 to vector<1x32xf32>
    %410 = arith.addf %409, %408 : vector<1x32xf32>
    %411 = arith.divf %409, %410 : vector<1x32xf32>
    %412 = vector.extract_strided_slice %399 {offsets = [0, 64], sizes = [1, 32], strides = [1, 1]} : vector<1x128xf32> to vector<1x32xf32>
    %413 = math.tanh %412 : vector<1x32xf32>
    %414 = vector.extract_strided_slice %399 {offsets = [0, 96], sizes = [1, 32], strides = [1, 1]} : vector<1x128xf32> to vector<1x32xf32>
    %415 = arith.negf %414 : vector<1x32xf32>
    %416 = math.exp %415 : vector<1x32xf32>
    %cst_126 = arith.constant 1.000000e+00 : f32
    %417 = vector.broadcast %cst_126 : f32 to vector<1x32xf32>
    %418 = arith.addf %417, %416 : vector<1x32xf32>
    %419 = arith.divf %417, %418 : vector<1x32xf32>
    %420 = arith.mulf %411, %393 : vector<1x32xf32>
    %421 = arith.mulf %405, %413 : vector<1x32xf32>
    %422 = arith.addf %420, %421 : vector<1x32xf32>
    %423 = math.tanh %422 : vector<1x32xf32>
    %424 = arith.mulf %419, %423 : vector<1x32xf32>
    %c5_127 = arith.constant 5 : index
    %c0_128 = arith.constant 0 : index
    %425 = vector.load %arg11[%c5_127, %c0_128] : memref<8x32xf32, #tpu.memory_space<vmem>>, vector<1x32xf32>
    tpu.vector_store %arg11[%c5_127, %c0_128], %424 {strides = array<i32>} : memref<8x32xf32, #tpu.memory_space<vmem>>, vector<1x32xf32>,
    %c6_129 = arith.constant 6 : index
    %c0_130 = arith.constant 0 : index
    %426 = vector.load %arg12[%c6_129, %c0_130] : memref<8x128xf32, #tpu.memory_space<vmem>>, vector<1x128xf32>
    %cst_131 = arith.constant dense<0.000000e+00> : vector<1x128xf32>
    %427 = tpu.matmul %424, %249, %cst_131 {dimension_numbers = #tpu.dot_dimension_numbers<[1], [0], [0], [1], [0, 0, 1, 1], [], []>} : vector<1x32xf32>, vector<32x128xf32>, vector<1x128xf32> -> vector<1x128xf32>
    %428 = arith.addf %426, %427 : vector<1x128xf32>
    %429 = vector.extract_strided_slice %428 {offsets = [0, 0], sizes = [1, 32], strides = [1, 1]} : vector<1x128xf32> to vector<1x32xf32>
    %430 = arith.negf %429 : vector<1x32xf32>
    %431 = math.exp %430 : vector<1x32xf32>
    %cst_132 = arith.constant 1.000000e+00 : f32
    %432 = vector.broadcast %cst_132 : f32 to vector<1x32xf32>
    %433 = arith.addf %432, %431 : vector<1x32xf32>
    %434 = arith.divf %432, %433 : vector<1x32xf32>
    %435 = vector.extract_strided_slice %428 {offsets = [0, 32], sizes = [1, 32], strides = [1, 1]} : vector<1x128xf32> to vector<1x32xf32>
    %436 = arith.negf %435 : vector<1x32xf32>
    %437 = math.exp %436 : vector<1x32xf32>
    %cst_133 = arith.constant 1.000000e+00 : f32
    %438 = vector.broadcast %cst_133 : f32 to vector<1x32xf32>
    %439 = arith.addf %438, %437 : vector<1x32xf32>
    %440 = arith.divf %438, %439 : vector<1x32xf32>
    %441 = vector.extract_strided_slice %428 {offsets = [0, 64], sizes = [1, 32], strides = [1, 1]} : vector<1x128xf32> to vector<1x32xf32>
    %442 = math.tanh %441 : vector<1x32xf32>
    %443 = vector.extract_strided_slice %428 {offsets = [0, 96], sizes = [1, 32], strides = [1, 1]} : vector<1x128xf32> to vector<1x32xf32>
    %444 = arith.negf %443 : vector<1x32xf32>
    %445 = math.exp %444 : vector<1x32xf32>
    %cst_134 = arith.constant 1.000000e+00 : f32
    %446 = vector.broadcast %cst_134 : f32 to vector<1x32xf32>
    %447 = arith.addf %446, %445 : vector<1x32xf32>
    %448 = arith.divf %446, %447 : vector<1x32xf32>
    %449 = arith.mulf %440, %422 : vector<1x32xf32>
    %450 = arith.mulf %434, %442 : vector<1x32xf32>
    %451 = arith.addf %449, %450 : vector<1x32xf32>
    %452 = math.tanh %451 : vector<1x32xf32>
    %453 = arith.mulf %448, %452 : vector<1x32xf32>
    %c6_135 = arith.constant 6 : index
    %c0_136 = arith.constant 0 : index
    %454 = vector.load %arg11[%c6_135, %c0_136] : memref<8x32xf32, #tpu.memory_space<vmem>>, vector<1x32xf32>
    tpu.vector_store %arg11[%c6_135, %c0_136], %453 {strides = array<i32>} : memref<8x32xf32, #tpu.memory_space<vmem>>, vector<1x32xf32>,
    %c7_137 = arith.constant 7 : index
    %c0_138 = arith.constant 0 : index
    %455 = vector.load %arg12[%c7_137, %c0_138] : memref<8x128xf32, #tpu.memory_space<vmem>>, vector<1x128xf32>
    %cst_139 = arith.constant dense<0.000000e+00> : vector<1x128xf32>
    %456 = tpu.matmul %453, %249, %cst_139 {dimension_numbers = #tpu.dot_dimension_numbers<[1], [0], [0], [1], [0, 0, 1, 1], [], []>} : vector<1x32xf32>, vector<32x128xf32>, vector<1x128xf32> -> vector<1x128xf32>
    %457 = arith.addf %455, %456 : vector<1x128xf32>
    %458 = vector.extract_strided_slice %457 {offsets = [0, 0], sizes = [1, 32], strides = [1, 1]} : vector<1x128xf32> to vector<1x32xf32>
    %459 = arith.negf %458 : vector<1x32xf32>
    %460 = math.exp %459 : vector<1x32xf32>
    %cst_140 = arith.constant 1.000000e+00 : f32
    %461 = vector.broadcast %cst_140 : f32 to vector<1x32xf32>
    %462 = arith.addf %461, %460 : vector<1x32xf32>
    %463 = arith.divf %461, %462 : vector<1x32xf32>
    %464 = vector.extract_strided_slice %457 {offsets = [0, 32], sizes = [1, 32], strides = [1, 1]} : vector<1x128xf32> to vector<1x32xf32>
    %465 = arith.negf %464 : vector<1x32xf32>
    %466 = math.exp %465 : vector<1x32xf32>
    %cst_141 = arith.constant 1.000000e+00 : f32
    %467 = vector.broadcast %cst_141 : f32 to vector<1x32xf32>
    %468 = arith.addf %467, %466 : vector<1x32xf32>
    %469 = arith.divf %467, %468 : vector<1x32xf32>
    %470 = vector.extract_strided_slice %457 {offsets = [0, 64], sizes = [1, 32], strides = [1, 1]} : vector<1x128xf32> to vector<1x32xf32>
    %471 = math.tanh %470 : vector<1x32xf32>
    %472 = vector.extract_strided_slice %457 {offsets = [0, 96], sizes = [1, 32], strides = [1, 1]} : vector<1x128xf32> to vector<1x32xf32>
    %473 = arith.negf %472 : vector<1x32xf32>
    %474 = math.exp %473 : vector<1x32xf32>
    %cst_142 = arith.constant 1.000000e+00 : f32
    %475 = vector.broadcast %cst_142 : f32 to vector<1x32xf32>
    %476 = arith.addf %475, %474 : vector<1x32xf32>
    %477 = arith.divf %475, %476 : vector<1x32xf32>
    %478 = arith.mulf %469, %451 : vector<1x32xf32>
    %479 = arith.mulf %463, %471 : vector<1x32xf32>
    %480 = arith.addf %478, %479 : vector<1x32xf32>
    %481 = math.tanh %480 : vector<1x32xf32>
    %482 = arith.mulf %477, %481 : vector<1x32xf32>
    %c7_143 = arith.constant 7 : index
    %c0_144 = arith.constant 0 : index
    %483 = vector.load %arg11[%c7_143, %c0_144] : memref<8x32xf32, #tpu.memory_space<vmem>>, vector<1x32xf32>
    tpu.vector_store %arg11[%c7_143, %c0_144], %482 {strides = array<i32>} : memref<8x32xf32, #tpu.memory_space<vmem>>, vector<1x32xf32>,
    %c0_145 = arith.constant 0 : index
    %c0_146 = arith.constant 0 : index
    %484 = vector.load %arg11[%c0_145, %c0_146] : memref<8x32xf32, #tpu.memory_space<vmem>>, vector<8x32xf32>
    %c0_147 = arith.constant 0 : index
    %c0_148 = arith.constant 0 : index
    %485 = vector.load %arg8[%c0_147, %c0_148] : memref<32x1xf32, #tpu.memory_space<vmem>>, vector<32x1xf32>
    %cst_149 = arith.constant dense<0.000000e+00> : vector<8x1xf32>
    %486 = tpu.matmul %484, %485, %cst_149 {dimension_numbers = #tpu.dot_dimension_numbers<[1], [0], [0], [1], [0, 0, 1, 1], [], []>} : vector<8x32xf32>, vector<32x1xf32>, vector<8x1xf32> -> vector<8x1xf32>
    %c0_150 = arith.constant 0 : index
    %c0_151 = arith.constant 0 : index
    %487 = vector.load %arg9[%c0_150, %c0_151] : memref<1x1xf32, #tpu.memory_space<vmem>>, vector<1x1xf32>
    %488 = vector.broadcast %487 : vector<1x1xf32> to vector<8x1xf32>
    %489 = arith.addf %486, %488 : vector<8x1xf32>
    %c0_152 = arith.constant 0 : index
    %c0_153 = arith.constant 0 : index
    %490 = vector.load %arg10[%c0_152, %c0_153] : memref<8x1xf32, #tpu.memory_space<vmem>>, vector<8x1xf32>
    tpu.vector_store %arg10[%c0_152, %c0_153], %489 {strides = array<i32>} : memref<8x1xf32, #tpu.memory_space<vmem>>, vector<8x1xf32>,
    return
  }
  func.func @transform_0(%arg0: i32) -> (i32, i32) {
    %c0_i32 = arith.constant 0 : i32
    %c0_i32_0 = arith.constant 0 : i32
    %c0_i32_1 = arith.constant 0 : i32
    return %c0_i32, %c0_i32_0 : i32, i32
  }
  func.func @transform_1(%arg0: i32) -> (i32, i32) {
    %c0_i32 = arith.constant 0 : i32
    %c0_i32_0 = arith.constant 0 : i32
    %c0_i32_1 = arith.constant 0 : i32
    return %c0_i32, %c0_i32_0 : i32, i32
  }
  func.func @transform_2(%arg0: i32) -> (i32, i32) {
    %c0_i32 = arith.constant 0 : i32
    %c0_i32_0 = arith.constant 0 : i32
    %c0_i32_1 = arith.constant 0 : i32
    return %c0_i32, %c0_i32_0 : i32, i32
  }
  func.func @transform_3(%arg0: i32) -> (i32, i32) {
    %c0_i32 = arith.constant 0 : i32
    %c0_i32_0 = arith.constant 0 : i32
    %c0_i32_1 = arith.constant 0 : i32
    return %c0_i32, %c0_i32_0 : i32, i32
  }
  func.func @transform_4(%arg0: i32) -> (i32, i32) {
    %c0_i32 = arith.constant 0 : i32
    %c0_i32_0 = arith.constant 0 : i32
    %c0_i32_1 = arith.constant 0 : i32
    return %c0_i32, %c0_i32_0 : i32, i32
  }
  func.func @transform_5(%arg0: i32) -> (i32, i32) {
    %c0_i32 = arith.constant 0 : i32
    %c0_i32_0 = arith.constant 0 : i32
    %c0_i32_1 = arith.constant 0 : i32
    return %c0_i32, %c0_i32_0 : i32, i32
  }
  func.func @transform_6(%arg0: i32) -> (i32, i32) {
    %c0_i32 = arith.constant 0 : i32
    %c0_i32_0 = arith.constant 0 : i32
    %c0_i32_1 = arith.constant 0 : i32
    return %c0_i32, %c0_i32_0 : i32, i32
  }
  func.func @transform_7(%arg0: i32) -> (i32, i32) {
    %c0_i32 = arith.constant 0 : i32
    %c0_i32_0 = arith.constant 0 : i32
    %c0_i32_1 = arith.constant 0 : i32
    return %c0_i32, %c0_i32_0 : i32, i32
  }
  func.func @transform_8(%arg0: i32) -> (i32, i32) {
    %c0_i32 = arith.constant 0 : i32
    %c0_i32_0 = arith.constant 0 : i32
    %c0_i32_1 = arith.constant 0 : i32
    return %c0_i32, %c0_i32_0 : i32, i32
  }
  func.func @transform_9(%arg0: i32) -> (i32, i32) {
    %c0_i32 = arith.constant 0 : i32
    %c0_i32_0 = arith.constant 0 : i32
    %c0_i32_1 = arith.constant 0 : i32
    return %c0_i32, %c0_i32_0 : i32, i32
  }
}

</mosaic_0001>

<llo_original>
// kernel: tpu_custom_call.1
$region0: #{tpu_custom_call.1}
  #allocation0 [shape = 'u32[]', space=smem, size = 0x4, offset = 0x4, fixed_abs, tag = 'smem constant byte address 0x4 - core index']
  #allocation1 [shape = 'u32[72,128]{1,0:T(1,128)}', space=vmem, size = 0x9000, scoped, tag = 'internal scratch']
  #allocation2 [shape = 'f32[8,32]{1,0:T(8,128)}', space=vmem, size = 0x1000, scoped, tag = 'scratch operand']
  #allocation3 [shape = 'f32[8,128]{1,0:T(8,128)}', space=vmem, size = 0x1000, scoped, tag = 'scratch operand']
  #allocation4 [shape = 'f32[1,1]{1,0:T(1,128)S(1)}', space=vmem, size = 0x200, scoped, tag = 'scoped memory for tpu_custom_call.1']
  %s0 = inlined_call_operand.hbm [shape: f32[8,16], index: 0, kind: input, shape index: {}]
  %s1 = inlined_call_operand.hbm [shape: f32[16,128], index: 1, kind: input, shape index: {}]
  %s2 = inlined_call_operand.vmem [shape: f32[32,128], index: 2, kind: input, shape index: {}]
  %s3 = inlined_call_operand.vmem [shape: f32[1,128], index: 3, kind: input, shape index: {}]
  %s4 = inlined_call_operand.hbm [shape: f32[32,128], index: 4, kind: input, shape index: {}]
  %s5 = inlined_call_operand.hbm [shape: f32[32,128], index: 5, kind: input, shape index: {}]
  %s6 = inlined_call_operand.vmem [shape: f32[1,128], index: 6, kind: input, shape index: {}]
  %s7 = inlined_call_operand.vmem [shape: f32[32,1], index: 7, kind: input, shape index: {}]
  %s8 = inlined_call_operand.<no memory space> [shape: f32[1,1], index: 8, kind: input, shape index: {}]
  %s9 = inlined_call_operand.vmem [shape: f32[8,1], index: 9, kind: output, shape index: {}]
  %s10 = sld [smem:[#allocation0]]
  $region62: #{tpu_custom_call.1} parent=0
    _
  %s12 = ssub.s32 1, %s10
  %s13 = scalar_select 0, %s12, %s10
  %v14 = vstv %s8
  %15 = vst [vmem:[#allocation4] sm:$0x1] %v14
  $region1: #{tpu_custom_call.1} parent=0
    #allocation5 [shape = 'u8[4096]{0}', space=vmem, size = 0x1000, scoped, tag = 'input window, operand 0, single buffered']
    #allocation6 [shape = 's32[1]{0}', space=sflag, size = 0x4, scoped, tag = 'scoped memory for tpu_custom_call.1']
    #allocation7 [shape = 'u8[8192]{0}', space=vmem, size = 0x2000, scoped, tag = 'input window, operand 1, single buffered']
    #allocation8 [shape = 's32[1]{0}', space=sflag, size = 0x4, scoped, tag = 'scoped memory for tpu_custom_call.1']
    #allocation9 [shape = 'u8[16384]{0}', space=vmem, size = 0x4000, scoped, tag = 'input window, operand 4, single buffered']
    #allocation10 [shape = 'u8[16384]{0}', space=vmem, size = 0x4000, scoped, tag = 'input window, operand 5, single buffered']
    #allocation11 [shape = 's32[1]{0}', space=sflag, size = 0x4, scoped, tag = 'scoped memory for tpu_custom_call.1']
    %16 = vsyncpa [#allocation6], 0
    %17 = vsyncpa [#allocation8], 0
    %18 = vsyncpa [#allocation11], 0
    // Predicated region
    $region2: #{tpu_custom_call.1} parent=1 // pred_check
      _
    $region3: #{tpu_custom_call.1} parent=1 // pred_check_branch
      %20 = sbr.rel (0) target = $region5
    $region4: #{tpu_custom_call.1} parent=1 // pred_region
      %22 = vsyncadd [#allocation6], 0
      %s24 = sshll.u32 %s0, 4
      %s25 = int_to_ptr.hbm [resolvable:$true] %s24
      %s26 = sshll.u32 [#allocation5], 4
      %s27 = int_to_ptr.vmem [resolvable:$true] %s26
      %29 = dma.hbm_to_vmem [thread:$0]  %s25, 128, %s27, [#allocation6]
    $region5: #{tpu_custom_call.1} parent=1 // pred_fallthru
      _
    // Predicated region
    $region6: #{tpu_custom_call.1} parent=1 // pred_check
      _
    $region7: #{tpu_custom_call.1} parent=1 // pred_check_branch
      %31 = sbr.rel (0) target = $region9
    $region8: #{tpu_custom_call.1} parent=1 // pred_region
      %33 = vsyncadd [#allocation8], 0
      %s34 = sshll.u32 %s1, 4
      %s35 = int_to_ptr.hbm [resolvable:$true] %s34
      %s36 = sshll.u32 [#allocation7], 4
      %s37 = int_to_ptr.vmem [resolvable:$true] %s36
      %42 = dma.hbm_to_vmem [thread:$0]  %s35, 256, %s37, [#allocation8], 128, 128, 8
    $region9: #{tpu_custom_call.1} parent=1 // pred_fallthru
      _
    // Predicated region
    $region10: #{tpu_custom_call.1} parent=1 // pred_check
      _
    $region11: #{tpu_custom_call.1} parent=1 // pred_check_branch
      %44 = sbr.rel (0) target = $region13
    $region12: #{tpu_custom_call.1} parent=1 // pred_region
      _
    $region13: #{tpu_custom_call.1} parent=1 // pred_fallthru
      _
    // Predicated region
    $region14: #{tpu_custom_call.1} parent=1 // pred_check
      _
    $region15: #{tpu_custom_call.1} parent=1 // pred_check_branch
      %46 = sbr.rel (0) target = $region17
    $region16: #{tpu_custom_call.1} parent=1 // pred_region
      _
    $region17: #{tpu_custom_call.1} parent=1 // pred_fallthru
      _
    // Predicated region
    $region18: #{tpu_custom_call.1} parent=1 // pred_check
      _
    $region19: #{tpu_custom_call.1} parent=1 // pred_check_branch
      %48 = sbr.rel (0) target = $region21
    $region20: #{tpu_custom_call.1} parent=1 // pred_region
      %50 = vsyncadd [#allocation8], 0
      %s51 = sshll.u32 %s4, 4
      %s52 = int_to_ptr.hbm [resolvable:$true] %s51
      %s53 = sshll.u32 [#allocation9], 4
      %s54 = int_to_ptr.vmem [resolvable:$true] %s53
      %59 = dma.hbm_to_vmem [thread:$0]  %s52, 512, %s54, [#allocation8], 128, 128, 8
    $region21: #{tpu_custom_call.1} parent=1 // pred_fallthru
      _
    // Predicated region
    $region22: #{tpu_custom_call.1} parent=1 // pred_check
      _
    $region23: #{tpu_custom_call.1} parent=1 // pred_check_branch
      %61 = sbr.rel (0) target = $region25
    $region24: #{tpu_custom_call.1} parent=1 // pred_region
      %63 = vsyncadd [#allocation11], 0
      %s64 = sshll.u32 %s5, 4
      %s65 = int_to_ptr.hbm [resolvable:$true] %s64
      %s66 = sshll.u32 [#allocation10], 4
      %s67 = int_to_ptr.vmem [resolvable:$true] %s66
      %72 = dma.hbm_to_vmem [thread:$0]  %s65, 512, %s67, [#allocation11], 128, 128, 8
    $region25: #{tpu_custom_call.1} parent=1 // pred_fallthru
      _
    // Predicated region
    $region26: #{tpu_custom_call.1} parent=1 // pred_check
      _
    $region27: #{tpu_custom_call.1} parent=1 // pred_check_branch
      %74 = sbr.rel (0) target = $region29
    $region28: #{tpu_custom_call.1} parent=1 // pred_region
      _
    $region29: #{tpu_custom_call.1} parent=1 // pred_fallthru
      _
    // Predicated region
    $region30: #{tpu_custom_call.1} parent=1 // pred_check
      _
    $region31: #{tpu_custom_call.1} parent=1 // pred_check_branch
      %76 = sbr.rel (0) target = $region33
    $region32: #{tpu_custom_call.1} parent=1 // pred_region
      _
    $region33: #{tpu_custom_call.1} parent=1 // pred_fallthru
      _
    // Predicated region
    $region34: #{tpu_custom_call.1} parent=1 // pred_check
      _
    $region35: #{tpu_custom_call.1} parent=1 // pred_check_branch
      %78 = sbr.rel (0) target = $region37
    $region36: #{tpu_custom_call.1} parent=1 // pred_region
      _
    $region37: #{tpu_custom_call.1} parent=1 // pred_fallthru
      _
    // Predicated region
    $region38: #{tpu_custom_call.1} parent=1 // pred_check
      _
    $region39: #{tpu_custom_call.1} parent=1 // pred_check_branch
      %80 = sbr.rel (0) target = $region41
    $region40: #{tpu_custom_call.1} parent=1 // pred_region
      %82 = dma.done [#allocation6], 128
    $region41: #{tpu_custom_call.1} parent=1 // pred_fallthru
      _
    // Predicated region
    $region42: #{tpu_custom_call.1} parent=1 // pred_check
      _
    $region43: #{tpu_custom_call.1} parent=1 // pred_check_branch
      %84 = sbr.rel (0) target = $region45
    $region44: #{tpu_custom_call.1} parent=1 // pred_region
      %86 = dma.done [#allocation8], 256
    $region45: #{tpu_custom_call.1} parent=1 // pred_fallthru
      _
    // Predicated region
    $region46: #{tpu_custom_call.1} parent=1 // pred_check
      _
    $region47: #{tpu_custom_call.1} parent=1 // pred_check_branch
      %88 = sbr.rel (0) target = $region49
    $region48: #{tpu_custom_call.1} parent=1 // pred_region
      %90 = dma.done [#allocation8], 512
    $region49: #{tpu_custom_call.1} parent=1 // pred_fallthru
      _
    // Predicated region
    $region50: #{tpu_custom_call.1} parent=1 // pred_check
      _
    $region51: #{tpu_custom_call.1} parent=1 // pred_check_branch
      %92 = sbr.rel (0) target = $region53
    $region52: #{tpu_custom_call.1} parent=1 // pred_region
      %94 = dma.done [#allocation11], 512
    $region53: #{tpu_custom_call.1} parent=1 // pred_fallthru
      _
    %v95 = vld [vmem:[#allocation5] sm:$0xff]
    %v96 = vld [vmem:[#allocation7] sm:$0xff]
    %v97 = vld [vmem:[#allocation7 + $0x8] sm:$0xff]
    %v98 = vld [vmem:[%s3] sm:$0x1]
    %v100 = vperm.slane %v98, 0
    %vm102 = vcmask 130048
    %v104 = vsel %vm102, %v95, 0
    %106 = vmatpush.msra.mxu0 0.0
    %107 = vmatpush.msra.mxu0 0.0
    %108 = vmatpush.msra.mxu0 0.0
    %109 = vmatpush.msra.mxu0 0.0
    %110 = vmatpush.msra.mxu0 0.0
    %111 = vmatpush.msra.mxu0 0.0
    %112 = vmatpush.msra.mxu0 0.0
    %113 = vmatpush.msra.mxu0 0.0
    %114 = vmatpush.msra.mxu0 0.0
    %115 = vmatpush.msra.mxu0 0.0
    %116 = vmatpush.msra.mxu0 0.0
    %117 = vmatpush.msra.mxu0 0.0
    %118 = vmatpush.msra.mxu0 0.0
    %119 = vmatpush.msra.mxu0 0.0
    %120 = vmatpush.msra.mxu0 %v97
    %121 = vmatpush.msra.mxu0 %v96
    %122 = vmatmul.f32.gmra.mxu0 %v104
    %v123 = vpop.f32.mrf.mxu0
    %v124 = vadd.f32 %v100, %v123
    %125 = vdwg.mxu0
    %126 = vst [vmem:[#allocation3] sm:$0xff] %v124
    %v127 = vld [vmem:[%s2] sm:$0xff]
    %v128 = vld [vmem:[%s2 + $0x8] sm:$0xff]
    %v129 = vld [vmem:[%s2 + $0x10] sm:$0xff]
    %v130 = vld [vmem:[%s2 + $0x18] sm:$0xff]
    %v131 = vld [vmem:[#allocation3] sm:$0x1]
    %vm132 = vcmask 261120
    %v134 = vsel %vm132, 0.0, 0
    %136 = vmatpush.msra.mxu0 0.0
    %137 = vmatpush.msra.mxu0 0.0
    %138 = vmatpush.msra.mxu0 0.0
    %139 = vmatpush.msra.mxu0 0.0
    %140 = vmatpush.msra.mxu0 0.0
    %141 = vmatpush.msra.mxu0 0.0
    %142 = vmatpush.msra.mxu0 0.0
    %143 = vmatpush.msra.mxu0 0.0
    %144 = vmatpush.msra.mxu0 0.0
    %145 = vmatpush.msra.mxu0 0.0
    %146 = vmatpush.msra.mxu0 0.0
    %147 = vmatpush.msra.mxu0 0.0
    %148 = vmatpush.msra.mxu0 %v130
    %149 = vmatpush.msra.mxu0 %v129
    %150 = vmatpush.msra.mxu0 %v128
    %151 = vmatpush.msra.mxu0 %v127
    %152 = vmatmul.f32.gmra.mxu0 %v134
    %v153 = vpop.f32.mrf.mxu0
    %v154 = vadd.f32 0.0, %v153
    %155 = vdwg.mxu0
    %v156 = vadd.f32 %v131, %v154
    %v157 = vxor.u32 %v156, 2147483648
    %v158 = vmul.f32 %v157, 1.442695
    %v159 = vpow.pop %v158
    %v160 = vadd.f32 %v159, 1.0
    %v161 = vrcp.pop %v160
    %v162 = vmul.f32 %v160, %v161
    %v163 = vsub.f32 1.0, %v162
    %v164 = vmul.f32 %v161, %v163
    %v165 = vadd.f32 %v161, %v164
    %vm166 = vweird.f32 %v160
    %vm167 = vweird.f32 %v161
    %vm168 = vmor %vm166, %vm167
    %v169 = vsel %vm168, %v161, %v165
    %v170 = vand.u32 2147483647, %v160
    %vm171 = vcmp.eq.f32.partialorder %v170, 8.507059e+37
    %v172 = vand.u32 %v160, 2147483648
    %v173 = vor.u32 1.1754944e-38, %v172
    %v174 = vsel %vm171, %v173, %v169
    %v175 = vmul.f32 1.0, %v174
    %v176 = vtanh.pop %v156
    %v177 = vmul.f32 %v175, 0.0
    %179 = vrot.lane.b32.xlu0 %v176, 64
    %v180 = vpop.permute.xlu0 %179
    %v182 = vmul.f32 %v175, %v180
    %184 = vrot.lane.b32.xlu0 %v182, 32
    %v185 = vpop.permute.xlu0 %184
    %v187 = vadd.f32 %v177, %v185
    %v188 = vtanh.pop %v187
    %190 = vrot.lane.b32.xlu0 %v188, 64
    %v191 = vpop.permute.xlu0 %190
    %v193 = vmul.f32 %v175, %v191
    %195 = vrot.lane.b32.xlu0 %v193, 32
    %v196 = vpop.permute.xlu0 %195
    %vm198 = vcmask 253952
    %199 = vst.msk [vmem:[#allocation2] sm:$0x1] %vm198, %v196
    %v200 = vld [vmem:[#allocation3 + $0x1] sm:$0x1]
    %v201 = vsel %vm132, %v196, 0
    %203 = vmatpush.msra.mxu0 0.0
    %204 = vmatpush.msra.mxu0 0.0
    %205 = vmatpush.msra.mxu0 0.0
    %206 = vmatpush.msra.mxu0 0.0
    %207 = vmatpush.msra.mxu0 0.0
    %208 = vmatpush.msra.mxu0 0.0
    %209 = vmatpush.msra.mxu0 0.0
    %210 = vmatpush.msra.mxu0 0.0
    %211 = vmatpush.msra.mxu0 0.0
    %212 = vmatpush.msra.mxu0 0.0
    %213 = vmatpush.msra.mxu0 0.0
    %214 = vmatpush.msra.mxu0 0.0
    %215 = vmatpush.msra.mxu0 %v130
    %216 = vmatpush.msra.mxu0 %v129
    %217 = vmatpush.msra.mxu0 %v128
    %218 = vmatpush.msra.mxu0 %v127
    %219 = vmatmul.f32.gmra.mxu0 %v201
    %v220 = vpop.f32.mrf.mxu0
    %v221 = vadd.f32 0.0, %v220
    %222 = vdwg.mxu0
    %v223 = vadd.f32 %v200, %v221
    %v224 = vxor.u32 %v223, 2147483648
    %v225 = vmul.f32 %v224, 1.442695
    %v226 = vpow.pop %v225
    %v227 = vadd.f32 %v226, 1.0
    %v228 = vrcp.pop %v227
    %v229 = vmul.f32 %v227, %v228
    %v230 = vsub.f32 1.0, %v229
    %v231 = vmul.f32 %v228, %v230
    %v232 = vadd.f32 %v228, %v231
    %vm233 = vweird.f32 %v227
    %vm234 = vweird.f32 %v228
    %vm235 = vmor %vm233, %vm234
    %v236 = vsel %vm235, %v228, %v232
    %v237 = vand.u32 2147483647, %v227
    %vm238 = vcmp.eq.f32.partialorder %v237, 8.507059e+37
    %v239 = vand.u32 %v227, 2147483648
    %v240 = vor.u32 1.1754944e-38, %v239
    %v241 = vsel %vm238, %v240, %v236
    %v242 = vmul.f32 1.0, %v241
    %v243 = vtanh.pop %v223
    %v244 = vmul.f32 %v242, %v187
    %246 = vrot.lane.b32.xlu0 %v243, 64
    %v247 = vpop.permute.xlu0 %246
    %v249 = vmul.f32 %v242, %v247
    %251 = vrot.lane.b32.xlu0 %v249, 32
    %v252 = vpop.permute.xlu0 %251
    %v254 = vadd.f32 %v244, %v252
    %v255 = vtanh.pop %v254
    %257 = vrot.lane.b32.xlu0 %v255, 64
    %v258 = vpop.permute.xlu0 %257
    %v260 = vmul.f32 %v242, %v258
    %262 = vrot.lane.b32.xlu0 %v260, 32
    %v263 = vpop.permute.xlu0 %262
    %265 = vst.msk [vmem:[#allocation2 + $0x1] sm:$0x1] %vm198, %v263
    %v266 = vld [vmem:[#allocation3 + $0x2] sm:$0x1]
    %v267 = vsel %vm132, %v263, 0
    %269 = vmatpush.msra.mxu0 0.0
    %270 = vmatpush.msra.mxu0 0.0
    %271 = vmatpush.msra.mxu0 0.0
    %272 = vmatpush.msra.mxu0 0.0
    %273 = vmatpush.msra.mxu0 0.0
    %274 = vmatpush.msra.mxu0 0.0
    %275 = vmatpush.msra.mxu0 0.0
    %276 = vmatpush.msra.mxu0 0.0
    %277 = vmatpush.msra.mxu0 0.0
    %278 = vmatpush.msra.mxu0 0.0
    %279 = vmatpush.msra.mxu0 0.0
    %280 = vmatpush.msra.mxu0 0.0
    %281 = vmatpush.msra.mxu0 %v130
    %282 = vmatpush.msra.mxu0 %v129
    %283 = vmatpush.msra.mxu0 %v128
    %284 = vmatpush.msra.mxu0 %v127
    %285 = vmatmul.f32.gmra.mxu0 %v267
    %v286 = vpop.f32.mrf.mxu0
    %v287 = vadd.f32 0.0, %v286
    %288 = vdwg.mxu0
    %v289 = vadd.f32 %v266, %v287
    %v290 = vxor.u32 %v289, 2147483648
    %v291 = vmul.f32 %v290, 1.442695
    %v292 = vpow.pop %v291
    %v293 = vadd.f32 %v292, 1.0
    %v294 = vrcp.pop %v293
    %v295 = vmul.f32 %v293, %v294
    %v296 = vsub.f32 1.0, %v295
    %v297 = vmul.f32 %v294, %v296
    %v298 = vadd.f32 %v294, %v297
    %vm299 = vweird.f32 %v293
    %vm300 = vweird.f32 %v294
    %vm301 = vmor %vm299, %vm300
    %v302 = vsel %vm301, %v294, %v298
    %v303 = vand.u32 2147483647, %v293
    %vm304 = vcmp.eq.f32.partialorder %v303, 8.507059e+37
    %v305 = vand.u32 %v293, 2147483648
    %v306 = vor.u32 1.1754944e-38, %v305
    %v307 = vsel %vm304, %v306, %v302
    %v308 = vmul.f32 1.0, %v307
    %v309 = vtanh.pop %v289
    %v310 = vmul.f32 %v308, %v254
    %312 = vrot.lane.b32.xlu0 %v309, 64
    %v313 = vpop.permute.xlu0 %312
    %v315 = vmul.f32 %v308, %v313
    %317 = vrot.lane.b32.xlu0 %v315, 32
    %v318 = vpop.permute.xlu0 %317
    %v320 = vadd.f32 %v310, %v318
    %v321 = vtanh.pop %v320
    %323 = vrot.lane.b32.xlu0 %v321, 64
    %v324 = vpop.permute.xlu0 %323
    %v326 = vmul.f32 %v308, %v324
    %328 = vrot.lane.b32.xlu0 %v326, 32
    %v329 = vpop.permute.xlu0 %328
    %331 = vst.msk [vmem:[#allocation2 + $0x2] sm:$0x1] %vm198, %v329
    %v332 = vld [vmem:[#allocation3 + $0x3] sm:$0x1]
    %v333 = vsel %vm132, %v329, 0
    %335 = vmatpush.msra.mxu0 0.0
    %336 = vmatpush.msra.mxu0 0.0
    %337 = vmatpush.msra.mxu0 0.0
    %338 = vmatpush.msra.mxu0 0.0
    %339 = vmatpush.msra.mxu0 0.0
    %340 = vmatpush.msra.mxu0 0.0
    %341 = vmatpush.msra.mxu0 0.0
    %342 = vmatpush.msra.mxu0 0.0
    %343 = vmatpush.msra.mxu0 0.0
    %344 = vmatpush.msra.mxu0 0.0
    %345 = vmatpush.msra.mxu0 0.0
    %346 = vmatpush.msra.mxu0 0.0
    %347 = vmatpush.msra.mxu0 %v130
    %348 = vmatpush.msra.mxu0 %v129
    %349 = vmatpush.msra.mxu0 %v128
    %350 = vmatpush.msra.mxu0 %v127
    %351 = vmatmul.f32.gmra.mxu0 %v333
    %v352 = vpop.f32.mrf.mxu0
    %v353 = vadd.f32 0.0, %v352
    %354 = vdwg.mxu0
    %v355 = vadd.f32 %v332, %v353
    %v356 = vxor.u32 %v355, 2147483648
    %v357 = vmul.f32 %v356, 1.442695
    %v358 = vpow.pop %v357
    %v359 = vadd.f32 %v358, 1.0
    %v360 = vrcp.pop %v359
    %v361 = vmul.f32 %v359, %v360
    %v362 = vsub.f32 1.0, %v361
    %v363 = vmul.f32 %v360, %v362
    %v364 = vadd.f32 %v360, %v363
    %vm365 = vweird.f32 %v359
    %vm366 = vweird.f32 %v360
    %vm367 = vmor %vm365, %vm366
    %v368 = vsel %vm367, %v360, %v364
    %v369 = vand.u32 2147483647, %v359
    %vm370 = vcmp.eq.f32.partialorder %v369, 8.507059e+37
    %v371 = vand.u32 %v359, 2147483648
    %v372 = vor.u32 1.1754944e-38, %v371
    %v373 = vsel %vm370, %v372, %v368
    %v374 = vmul.f32 1.0, %v373
    %v375 = vtanh.pop %v355
    %v376 = vmul.f32 %v374, %v320
    %378 = vrot.lane.b32.xlu0 %v375, 64
    %v379 = vpop.permute.xlu0 %378
    %v381 = vmul.f32 %v374, %v379
    %383 = vrot.lane.b32.xlu0 %v381, 32
    %v384 = vpop.permute.xlu0 %383
    %v386 = vadd.f32 %v376, %v384
    %v387 = vtanh.pop %v386
    %389 = vrot.lane.b32.xlu0 %v387, 64
    %v390 = vpop.permute.xlu0 %389
    %v392 = vmul.f32 %v374, %v390
    %394 = vrot.lane.b32.xlu0 %v392, 32
    %v395 = vpop.permute.xlu0 %394
    %397 = vst.msk [vmem:[#allocation2 + $0x3] sm:$0x1] %vm198, %v395
    %v398 = vld [vmem:[#allocation3 + $0x4] sm:$0x1]
    %v399 = vsel %vm132, %v395, 0
    %401 = vmatpush.msra.mxu0 0.0
    %402 = vmatpush.msra.mxu0 0.0
    %403 = vmatpush.msra.mxu0 0.0
    %404 = vmatpush.msra.mxu0 0.0
    %405 = vmatpush.msra.mxu0 0.0
    %406 = vmatpush.msra.mxu0 0.0
    %407 = vmatpush.msra.mxu0 0.0
    %408 = vmatpush.msra.mxu0 0.0
    %409 = vmatpush.msra.mxu0 0.0
    %410 = vmatpush.msra.mxu0 0.0
    %411 = vmatpush.msra.mxu0 0.0
    %412 = vmatpush.msra.mxu0 0.0
    %413 = vmatpush.msra.mxu0 %v130
    %414 = vmatpush.msra.mxu0 %v129
    %415 = vmatpush.msra.mxu0 %v128
    %416 = vmatpush.msra.mxu0 %v127
    %417 = vmatmul.f32.gmra.mxu0 %v399
    %v418 = vpop.f32.mrf.mxu0
    %v419 = vadd.f32 0.0, %v418
    %420 = vdwg.mxu0
    %v421 = vadd.f32 %v398, %v419
    %v422 = vxor.u32 %v421, 2147483648
    %v423 = vmul.f32 %v422, 1.442695
    %v424 = vpow.pop %v423
    %v425 = vadd.f32 %v424, 1.0
    %v426 = vrcp.pop %v425
    %v427 = vmul.f32 %v425, %v426
    %v428 = vsub.f32 1.0, %v427
    %v429 = vmul.f32 %v426, %v428
    %v430 = vadd.f32 %v426, %v429
    %vm431 = vweird.f32 %v425
    %vm432 = vweird.f32 %v426
    %vm433 = vmor %vm431, %vm432
    %v434 = vsel %vm433, %v426, %v430
    %v435 = vand.u32 2147483647, %v425
    %vm436 = vcmp.eq.f32.partialorder %v435, 8.507059e+37
    %v437 = vand.u32 %v425, 2147483648
    %v438 = vor.u32 1.1754944e-38, %v437
    %v439 = vsel %vm436, %v438, %v434
    %v440 = vmul.f32 1.0, %v439
    %v441 = vtanh.pop %v421
    %v442 = vmul.f32 %v440, %v386
    %444 = vrot.lane.b32.xlu0 %v441, 64
    %v445 = vpop.permute.xlu0 %444
    %v447 = vmul.f32 %v440, %v445
    %449 = vrot.lane.b32.xlu0 %v447, 32
    %v450 = vpop.permute.xlu0 %449
    %v452 = vadd.f32 %v442, %v450
    %v453 = vtanh.pop %v452
    %455 = vrot.lane.b32.xlu0 %v453, 64
    %v456 = vpop.permute.xlu0 %455
    %v458 = vmul.f32 %v440, %v456
    %460 = vrot.lane.b32.xlu0 %v458, 32
    %v461 = vpop.permute.xlu0 %460
    %463 = vst.msk [vmem:[#allocation2 + $0x4] sm:$0x1] %vm198, %v461
    %v464 = vld [vmem:[#allocation3 + $0x5] sm:$0x1]
    %v465 = vsel %vm132, %v461, 0
    %467 = vmatpush.msra.mxu0 0.0
    %468 = vmatpush.msra.mxu0 0.0
    %469 = vmatpush.msra.mxu0 0.0
    %470 = vmatpush.msra.mxu0 0.0
    %471 = vmatpush.msra.mxu0 0.0
    %472 = vmatpush.msra.mxu0 0.0
    %473 = vmatpush.msra.mxu0 0.0
    %474 = vmatpush.msra.mxu0 0.0
    %475 = vmatpush.msra.mxu0 0.0
    %476 = vmatpush.msra.mxu0 0.0
    %477 = vmatpush.msra.mxu0 0.0
    %478 = vmatpush.msra.mxu0 0.0
    %479 = vmatpush.msra.mxu0 %v130
    %480 = vmatpush.msra.mxu0 %v129
    %481 = vmatpush.msra.mxu0 %v128
    %482 = vmatpush.msra.mxu0 %v127
    %483 = vmatmul.f32.gmra.mxu0 %v465
    %v484 = vpop.f32.mrf.mxu0
    %v485 = vadd.f32 0.0, %v484
    %486 = vdwg.mxu0
    %v487 = vadd.f32 %v464, %v485
    %v488 = vxor.u32 %v487, 2147483648
    %v489 = vmul.f32 %v488, 1.442695
    %v490 = vpow.pop %v489
    %v491 = vadd.f32 %v490, 1.0
    %v492 = vrcp.pop %v491
    %v493 = vmul.f32 %v491, %v492
    %v494 = vsub.f32 1.0, %v493
    %v495 = vmul.f32 %v492, %v494
    %v496 = vadd.f32 %v492, %v495
    %vm497 = vweird.f32 %v491
    %vm498 = vweird.f32 %v492
    %vm499 = vmor %vm497, %vm498
    %v500 = vsel %vm499, %v492, %v496
    %v501 = vand.u32 2147483647, %v491
    %vm502 = vcmp.eq.f32.partialorder %v501, 8.507059e+37
    %v503 = vand.u32 %v491, 2147483648
    %v504 = vor.u32 1.1754944e-38, %v503
    %v505 = vsel %vm502, %v504, %v500
    %v506 = vmul.f32 1.0, %v505
    %v507 = vtanh.pop %v487
    %v508 = vmul.f32 %v506, %v452
    %510 = vrot.lane.b32.xlu0 %v507, 64
    %v511 = vpop.permute.xlu0 %510
    %v513 = vmul.f32 %v506, %v511
    %515 = vrot.lane.b32.xlu0 %v513, 32
    %v516 = vpop.permute.xlu0 %515
    %v518 = vadd.f32 %v508, %v516
    %v519 = vtanh.pop %v518
    %521 = vrot.lane.b32.xlu0 %v519, 64
    %v522 = vpop.permute.xlu0 %521
    %v524 = vmul.f32 %v506, %v522
    %526 = vrot.lane.b32.xlu0 %v524, 32
    %v527 = vpop.permute.xlu0 %526
    %529 = vst.msk [vmem:[#allocation2 + $0x5] sm:$0x1] %vm198, %v527
    %v530 = vld [vmem:[#allocation3 + $0x6] sm:$0x1]
    %v531 = vsel %vm132, %v527, 0
    %533 = vmatpush.msra.mxu0 0.0
    %534 = vmatpush.msra.mxu0 0.0
    %535 = vmatpush.msra.mxu0 0.0
    %536 = vmatpush.msra.mxu0 0.0
    %537 = vmatpush.msra.mxu0 0.0
    %538 = vmatpush.msra.mxu0 0.0
    %539 = vmatpush.msra.mxu0 0.0
    %540 = vmatpush.msra.mxu0 0.0
    %541 = vmatpush.msra.mxu0 0.0
    %542 = vmatpush.msra.mxu0 0.0
    %543 = vmatpush.msra.mxu0 0.0
    %544 = vmatpush.msra.mxu0 0.0
    %545 = vmatpush.msra.mxu0 %v130
    %546 = vmatpush.msra.mxu0 %v129
    %547 = vmatpush.msra.mxu0 %v128
    %548 = vmatpush.msra.mxu0 %v127
    %549 = vmatmul.f32.gmra.mxu0 %v531
    %v550 = vpop.f32.mrf.mxu0
    %v551 = vadd.f32 0.0, %v550
    %552 = vdwg.mxu0
    %v553 = vadd.f32 %v530, %v551
    %v554 = vxor.u32 %v553, 2147483648
    %v555 = vmul.f32 %v554, 1.442695
    %v556 = vpow.pop %v555
    %v557 = vadd.f32 %v556, 1.0
    %v558 = vrcp.pop %v557
    %v559 = vmul.f32 %v557, %v558
    %v560 = vsub.f32 1.0, %v559
    %v561 = vmul.f32 %v558, %v560
    %v562 = vadd.f32 %v558, %v561
    %vm563 = vweird.f32 %v557
    %vm564 = vweird.f32 %v558
    %vm565 = vmor %vm563, %vm564
    %v566 = vsel %vm565, %v558, %v562
    %v567 = vand.u32 2147483647, %v557
    %vm568 = vcmp.eq.f32.partialorder %v567, 8.507059e+37
    %v569 = vand.u32 %v557, 2147483648
    %v570 = vor.u32 1.1754944e-38, %v569
    %v571 = vsel %vm568, %v570, %v566
    %v572 = vmul.f32 1.0, %v571
    %v573 = vtanh.pop %v553
    %v574 = vmul.f32 %v572, %v518
    %576 = vrot.lane.b32.xlu0 %v573, 64
    %v577 = vpop.permute.xlu0 %576
    %v579 = vmul.f32 %v572, %v577
    %581 = vrot.lane.b32.xlu0 %v579, 32
    %v582 = vpop.permute.xlu0 %581
    %v584 = vadd.f32 %v574, %v582
    %v585 = vtanh.pop %v584
    %587 = vrot.lane.b32.xlu0 %v585, 64
    %v588 = vpop.permute.xlu0 %587
    %v590 = vmul.f32 %v572, %v588
    %592 = vrot.lane.b32.xlu0 %v590, 32
    %v593 = vpop.permute.xlu0 %592
    %595 = vst.msk [vmem:[#allocation2 + $0x6] sm:$0x1] %vm198, %v593
    %v596 = vld [vmem:[#allocation3 + $0x7] sm:$0x1]
    %v597 = vsel %vm132, %v593, 0
    %599 = vmatpush.msra.mxu0 0.0
    %600 = vmatpush.msra.mxu0 0.0
    %601 = vmatpush.msra.mxu0 0.0
    %602 = vmatpush.msra.mxu0 0.0
    %603 = vmatpush.msra.mxu0 0.0
    %604 = vmatpush.msra.mxu0 0.0
    %605 = vmatpush.msra.mxu0 0.0
    %606 = vmatpush.msra.mxu0 0.0
    %607 = vmatpush.msra.mxu0 0.0
    %608 = vmatpush.msra.mxu0 0.0
    %609 = vmatpush.msra.mxu0 0.0
    %610 = vmatpush.msra.mxu0 0.0
    %611 = vmatpush.msra.mxu0 %v130
    %612 = vmatpush.msra.mxu0 %v129
    %613 = vmatpush.msra.mxu0 %v128
    %614 = vmatpush.msra.mxu0 %v127
    %615 = vmatmul.f32.gmra.mxu0 %v597
    %v616 = vpop.f32.mrf.mxu0
    %v617 = vadd.f32 0.0, %v616
    %618 = vdwg.mxu0
    %v619 = vadd.f32 %v596, %v617
    %v620 = vxor.u32 %v619, 2147483648
    %v621 = vmul.f32 %v620, 1.442695
    %v622 = vpow.pop %v621
    %v623 = vadd.f32 %v622, 1.0
    %v624 = vrcp.pop %v623
    %v625 = vmul.f32 %v623, %v624
    %v626 = vsub.f32 1.0, %v625
    %v627 = vmul.f32 %v624, %v626
    %v628 = vadd.f32 %v624, %v627
    %vm629 = vweird.f32 %v623
    %vm630 = vweird.f32 %v624
    %vm631 = vmor %vm629, %vm630
    %v632 = vsel %vm631, %v624, %v628
    %v633 = vand.u32 2147483647, %v623
    %vm634 = vcmp.eq.f32.partialorder %v633, 8.507059e+37
    %v635 = vand.u32 %v623, 2147483648
    %v636 = vor.u32 1.1754944e-38, %v635
    %v637 = vsel %vm634, %v636, %v632
    %v638 = vmul.f32 1.0, %v637
    %v639 = vtanh.pop %v619
    %v640 = vmul.f32 %v638, %v584
    %642 = vrot.lane.b32.xlu0 %v639, 64
    %v643 = vpop.permute.xlu0 %642
    %v645 = vmul.f32 %v638, %v643
    %647 = vrot.lane.b32.xlu0 %v645, 32
    %v648 = vpop.permute.xlu0 %647
    %v650 = vadd.f32 %v640, %v648
    %v651 = vtanh.pop %v650
    %653 = vrot.lane.b32.xlu0 %v651, 64
    %v654 = vpop.permute.xlu0 %653
    %v656 = vmul.f32 %v638, %v654
    %658 = vrot.lane.b32.xlu0 %v656, 32
    %v659 = vpop.permute.xlu0 %658
    %661 = vst.msk [vmem:[#allocation2 + $0x7] sm:$0x1] %vm198, %v659
    %v662 = vld [vmem:[#allocation2] sm:$0xff]
    %v663 = vld [vmem:[#allocation9] sm:$0xff]
    %v664 = vld [vmem:[#allocation9 + $0x8] sm:$0xff]
    %v665 = vld [vmem:[#allocation9 + $0x10] sm:$0xff]
    %v666 = vld [vmem:[#allocation9 + $0x18] sm:$0xff]
    %v667 = vld [vmem:[%s6] sm:$0x1]
    %v669 = vperm.slane %v667, 0
    %v672 = vsel %vm132, %v662, 0
    %674 = vmatpush.msra.mxu0 0.0
    %675 = vmatpush.msra.mxu0 0.0
    %676 = vmatpush.msra.mxu0 0.0
    %677 = vmatpush.msra.mxu0 0.0
    %678 = vmatpush.msra.mxu0 0.0
    %679 = vmatpush.msra.mxu0 0.0
    %680 = vmatpush.msra.mxu0 0.0
    %681 = vmatpush.msra.mxu0 0.0
    %682 = vmatpush.msra.mxu0 0.0
    %683 = vmatpush.msra.mxu0 0.0
    %684 = vmatpush.msra.mxu0 0.0
    %685 = vmatpush.msra.mxu0 0.0
    %686 = vmatpush.msra.mxu0 %v666
    %687 = vmatpush.msra.mxu0 %v665
    %688 = vmatpush.msra.mxu0 %v664
    %689 = vmatpush.msra.mxu0 %v663
    %690 = vmatmul.f32.gmra.mxu0 %v672
    %v691 = vpop.f32.mrf.mxu0
    %v692 = vadd.f32 %v669, %v691
    %693 = vdwg.mxu0
    %694 = vst [vmem:[#allocation3] sm:$0xff] %v692
    %v695 = vld [vmem:[#allocation10] sm:$0xff]
    %v696 = vld [vmem:[#allocation10 + $0x8] sm:$0xff]
    %v697 = vld [vmem:[#allocation10 + $0x10] sm:$0xff]
    %v698 = vld [vmem:[#allocation10 + $0x18] sm:$0xff]
    %v699 = vld [vmem:[#allocation3] sm:$0x1]
    %700 = vmatpush.msra.mxu0 0.0
    %701 = vmatpush.msra.mxu0 0.0
    %702 = vmatpush.msra.mxu0 0.0
    %703 = vmatpush.msra.mxu0 0.0
    %704 = vmatpush.msra.mxu0 0.0
    %705 = vmatpush.msra.mxu0 0.0
    %706 = vmatpush.msra.mxu0 0.0
    %707 = vmatpush.msra.mxu0 0.0
    %708 = vmatpush.msra.mxu0 0.0
    %709 = vmatpush.msra.mxu0 0.0
    %710 = vmatpush.msra.mxu0 0.0
    %711 = vmatpush.msra.mxu0 0.0
    %712 = vmatpush.msra.mxu0 %v698
    %713 = vmatpush.msra.mxu0 %v697
    %714 = vmatpush.msra.mxu0 %v696
    %715 = vmatpush.msra.mxu0 %v695
    %716 = vmatmul.f32.gmra.mxu0 %v134
    %v717 = vpop.f32.mrf.mxu0
    %v718 = vadd.f32 0.0, %v717
    %719 = vdwg.mxu0
    %v720 = vadd.f32 %v699, %v718
    %v721 = vxor.u32 %v720, 2147483648
    %v722 = vmul.f32 %v721, 1.442695
    %v723 = vpow.pop %v722
    %v724 = vadd.f32 %v723, 1.0
    %v725 = vrcp.pop %v724
    %v726 = vmul.f32 %v724, %v725
    %v727 = vsub.f32 1.0, %v726
    %v728 = vmul.f32 %v725, %v727
    %v729 = vadd.f32 %v725, %v728
    %vm730 = vweird.f32 %v724
    %vm731 = vweird.f32 %v725
    %vm732 = vmor %vm730, %vm731
    %v733 = vsel %vm732, %v725, %v729
    %v734 = vand.u32 2147483647, %v724
    %vm735 = vcmp.eq.f32.partialorder %v734, 8.507059e+37
    %v736 = vand.u32 %v724, 2147483648
    %v737 = vor.u32 1.1754944e-38, %v736
    %v738 = vsel %vm735, %v737, %v733
    %v739 = vmul.f32 1.0, %v738
    %v740 = vtanh.pop %v720
    %v741 = vmul.f32 %v739, 0.0
    %743 = vrot.lane.b32.xlu0 %v740, 64
    %v744 = vpop.permute.xlu0 %743
    %v746 = vmul.f32 %v739, %v744
    %748 = vrot.lane.b32.xlu0 %v746, 32
    %v749 = vpop.permute.xlu0 %748
    %v751 = vadd.f32 %v741, %v749
    %v752 = vtanh.pop %v751
    %754 = vrot.lane.b32.xlu0 %v752, 64
    %v755 = vpop.permute.xlu0 %754
    %v757 = vmul.f32 %v739, %v755
    %759 = vrot.lane.b32.xlu0 %v757, 32
    %v760 = vpop.permute.xlu0 %759
    %762 = vst.msk [vmem:[#allocation2] sm:$0x1] %vm198, %v760
    %v763 = vld [vmem:[#allocation3 + $0x1] sm:$0x1]
    %v764 = vsel %vm132, %v760, 0
    %766 = vmatpush.msra.mxu0 0.0
    %767 = vmatpush.msra.mxu0 0.0
    %768 = vmatpush.msra.mxu0 0.0
    %769 = vmatpush.msra.mxu0 0.0
    %770 = vmatpush.msra.mxu0 0.0
    %771 = vmatpush.msra.mxu0 0.0
    %772 = vmatpush.msra.mxu0 0.0
    %773 = vmatpush.msra.mxu0 0.0
    %774 = vmatpush.msra.mxu0 0.0
    %775 = vmatpush.msra.mxu0 0.0
    %776 = vmatpush.msra.mxu0 0.0
    %777 = vmatpush.msra.mxu0 0.0
    %778 = vmatpush.msra.mxu0 %v698
    %779 = vmatpush.msra.mxu0 %v697
    %780 = vmatpush.msra.mxu0 %v696
    %781 = vmatpush.msra.mxu0 %v695
    %782 = vmatmul.f32.gmra.mxu0 %v764
    %v783 = vpop.f32.mrf.mxu0
    %v784 = vadd.f32 0.0, %v783
    %785 = vdwg.mxu0
    %v786 = vadd.f32 %v763, %v784
    %v787 = vxor.u32 %v786, 2147483648
    %v788 = vmul.f32 %v787, 1.442695
    %v789 = vpow.pop %v788
    %v790 = vadd.f32 %v789, 1.0
    %v791 = vrcp.pop %v790
    %v792 = vmul.f32 %v790, %v791
    %v793 = vsub.f32 1.0, %v792
    %v794 = vmul.f32 %v791, %v793
    %v795 = vadd.f32 %v791, %v794
    %vm796 = vweird.f32 %v790
    %vm797 = vweird.f32 %v791
    %vm798 = vmor %vm796, %vm797
    %v799 = vsel %vm798, %v791, %v795
    %v800 = vand.u32 2147483647, %v790
    %vm801 = vcmp.eq.f32.partialorder %v800, 8.507059e+37
    %v802 = vand.u32 %v790, 2147483648
    %v803 = vor.u32 1.1754944e-38, %v802
    %v804 = vsel %vm801, %v803, %v799
    %v805 = vmul.f32 1.0, %v804
    %v806 = vtanh.pop %v786
    %v807 = vmul.f32 %v805, %v751
    %809 = vrot.lane.b32.xlu0 %v806, 64
    %v810 = vpop.permute.xlu0 %809
    %v812 = vmul.f32 %v805, %v810
    %814 = vrot.lane.b32.xlu0 %v812, 32
    %v815 = vpop.permute.xlu0 %814
    %v817 = vadd.f32 %v807, %v815
    %v818 = vtanh.pop %v817
    %820 = vrot.lane.b32.xlu0 %v818, 64
    %v821 = vpop.permute.xlu0 %820
    %v823 = vmul.f32 %v805, %v821
    %825 = vrot.lane.b32.xlu0 %v823, 32
    %v826 = vpop.permute.xlu0 %825
    %828 = vst.msk [vmem:[#allocation2 + $0x1] sm:$0x1] %vm198, %v826
    %v829 = vld [vmem:[#allocation3 + $0x2] sm:$0x1]
    %v830 = vsel %vm132, %v826, 0
    %832 = vmatpush.msra.mxu0 0.0
    %833 = vmatpush.msra.mxu0 0.0
    %834 = vmatpush.msra.mxu0 0.0
    %835 = vmatpush.msra.mxu0 0.0
    %836 = vmatpush.msra.mxu0 0.0
    %837 = vmatpush.msra.mxu0 0.0
    %838 = vmatpush.msra.mxu0 0.0
    %839 = vmatpush.msra.mxu0 0.0
    %840 = vmatpush.msra.mxu0 0.0
    %841 = vmatpush.msra.mxu0 0.0
    %842 = vmatpush.msra.mxu0 0.0
    %843 = vmatpush.msra.mxu0 0.0
    %844 = vmatpush.msra.mxu0 %v698
    %845 = vmatpush.msra.mxu0 %v697
    %846 = vmatpush.msra.mxu0 %v696
    %847 = vmatpush.msra.mxu0 %v695
    %848 = vmatmul.f32.gmra.mxu0 %v830
    %v849 = vpop.f32.mrf.mxu0
    %v850 = vadd.f32 0.0, %v849
    %851 = vdwg.mxu0
    %v852 = vadd.f32 %v829, %v850
    %v853 = vxor.u32 %v852, 2147483648
    %v854 = vmul.f32 %v853, 1.442695
    %v855 = vpow.pop %v854
    %v856 = vadd.f32 %v855, 1.0
    %v857 = vrcp.pop %v856
    %v858 = vmul.f32 %v856, %v857
    %v859 = vsub.f32 1.0, %v858
    %v860 = vmul.f32 %v857, %v859
    %v861 = vadd.f32 %v857, %v860
    %vm862 = vweird.f32 %v856
    %vm863 = vweird.f32 %v857
    %vm864 = vmor %vm862, %vm863
    %v865 = vsel %vm864, %v857, %v861
    %v866 = vand.u32 2147483647, %v856
    %vm867 = vcmp.eq.f32.partialorder %v866, 8.507059e+37
    %v868 = vand.u32 %v856, 2147483648
    %v869 = vor.u32 1.1754944e-38, %v868
    %v870 = vsel %vm867, %v869, %v865
    %v871 = vmul.f32 1.0, %v870
    %v872 = vtanh.pop %v852
    %v873 = vmul.f32 %v871, %v817
    %875 = vrot.lane.b32.xlu0 %v872, 64
    %v876 = vpop.permute.xlu0 %875
    %v878 = vmul.f32 %v871, %v876
    %880 = vrot.lane.b32.xlu0 %v878, 32
    %v881 = vpop.permute.xlu0 %880
    %v883 = vadd.f32 %v873, %v881
    %v884 = vtanh.pop %v883
    %886 = vrot.lane.b32.xlu0 %v884, 64
    %v887 = vpop.permute.xlu0 %886
    %v889 = vmul.f32 %v871, %v887
    %891 = vrot.lane.b32.xlu0 %v889, 32
    %v892 = vpop.permute.xlu0 %891
    %894 = vst.msk [vmem:[#allocation2 + $0x2] sm:$0x1] %vm198, %v892
    %v895 = vld [vmem:[#allocation3 + $0x3] sm:$0x1]
    %v896 = vsel %vm132, %v892, 0
    %898 = vmatpush.msra.mxu0 0.0
    %899 = vmatpush.msra.mxu0 0.0
    %900 = vmatpush.msra.mxu0 0.0
    %901 = vmatpush.msra.mxu0 0.0
    %902 = vmatpush.msra.mxu0 0.0
    %903 = vmatpush.msra.mxu0 0.0
    %904 = vmatpush.msra.mxu0 0.0
    %905 = vmatpush.msra.mxu0 0.0
    %906 = vmatpush.msra.mxu0 0.0
    %907 = vmatpush.msra.mxu0 0.0
    %908 = vmatpush.msra.mxu0 0.0
    %909 = vmatpush.msra.mxu0 0.0
    %910 = vmatpush.msra.mxu0 %v698
    %911 = vmatpush.msra.mxu0 %v697
    %912 = vmatpush.msra.mxu0 %v696
    %913 = vmatpush.msra.mxu0 %v695
    %914 = vmatmul.f32.gmra.mxu0 %v896
    %v915 = vpop.f32.mrf.mxu0
    %v916 = vadd.f32 0.0, %v915
    %917 = vdwg.mxu0
    %v918 = vadd.f32 %v895, %v916
    %v919 = vxor.u32 %v918, 2147483648
    %v920 = vmul.f32 %v919, 1.442695
    %v921 = vpow.pop %v920
    %v922 = vadd.f32 %v921, 1.0
    %v923 = vrcp.pop %v922
    %v924 = vmul.f32 %v922, %v923
    %v925 = vsub.f32 1.0, %v924
    %v926 = vmul.f32 %v923, %v925
    %v927 = vadd.f32 %v923, %v926
    %vm928 = vweird.f32 %v922
    %vm929 = vweird.f32 %v923
    %vm930 = vmor %vm928, %vm929
    %v931 = vsel %vm930, %v923, %v927
    %v932 = vand.u32 2147483647, %v922
    %vm933 = vcmp.eq.f32.partialorder %v932, 8.507059e+37
    %v934 = vand.u32 %v922, 2147483648
    %v935 = vor.u32 1.1754944e-38, %v934
    %v936 = vsel %vm933, %v935, %v931
    %v937 = vmul.f32 1.0, %v936
    %v938 = vtanh.pop %v918
    %v939 = vmul.f32 %v937, %v883
    %941 = vrot.lane.b32.xlu0 %v938, 64
    %v942 = vpop.permute.xlu0 %941
    %v944 = vmul.f32 %v937, %v942
    %946 = vrot.lane.b32.xlu0 %v944, 32
    %v947 = vpop.permute.xlu0 %946
    %v949 = vadd.f32 %v939, %v947
    %v950 = vtanh.pop %v949
    %952 = vrot.lane.b32.xlu0 %v950, 64
    %v953 = vpop.permute.xlu0 %952
    %v955 = vmul.f32 %v937, %v953
    %957 = vrot.lane.b32.xlu0 %v955, 32
    %v958 = vpop.permute.xlu0 %957
    %960 = vst.msk [vmem:[#allocation2 + $0x3] sm:$0x1] %vm198, %v958
    %v961 = vld [vmem:[#allocation3 + $0x4] sm:$0x1]
    %v962 = vsel %vm132, %v958, 0
    %964 = vmatpush.msra.mxu0 0.0
    %965 = vmatpush.msra.mxu0 0.0
    %966 = vmatpush.msra.mxu0 0.0
    %967 = vmatpush.msra.mxu0 0.0
    %968 = vmatpush.msra.mxu0 0.0
    %969 = vmatpush.msra.mxu0 0.0
    %970 = vmatpush.msra.mxu0 0.0
    %971 = vmatpush.msra.mxu0 0.0
    %972 = vmatpush.msra.mxu0 0.0
    %973 = vmatpush.msra.mxu0 0.0
    %974 = vmatpush.msra.mxu0 0.0
    %975 = vmatpush.msra.mxu0 0.0
    %976 = vmatpush.msra.mxu0 %v698
    %977 = vmatpush.msra.mxu0 %v697
    %978 = vmatpush.msra.mxu0 %v696
    %979 = vmatpush.msra.mxu0 %v695
    %980 = vmatmul.f32.gmra.mxu0 %v962
    %v981 = vpop.f32.mrf.mxu0
    %v982 = vadd.f32 0.0, %v981
    %983 = vdwg.mxu0
    %v984 = vadd.f32 %v961, %v982
    %v985 = vxor.u32 %v984, 2147483648
    %v986 = vmul.f32 %v985, 1.442695
    %v987 = vpow.pop %v986
    %v988 = vadd.f32 %v987, 1.0
    %v989 = vrcp.pop %v988
    %v990 = vmul.f32 %v988, %v989
    %v991 = vsub.f32 1.0, %v990
    %v992 = vmul.f32 %v989, %v991
    %v993 = vadd.f32 %v989, %v992
    %vm994 = vweird.f32 %v988
    %vm995 = vweird.f32 %v989
    %vm996 = vmor %vm994, %vm995
    %v997 = vsel %vm996, %v989, %v993
    %v998 = vand.u32 2147483647, %v988
    %vm999 = vcmp.eq.f32.partialorder %v998, 8.507059e+37
    %v1000 = vand.u32 %v988, 2147483648
    %v1001 = vor.u32 1.1754944e-38, %v1000
    %v1002 = vsel %vm999, %v1001, %v997
    %v1003 = vmul.f32 1.0, %v1002
    %v1004 = vtanh.pop %v984
    %v1005 = vmul.f32 %v1003, %v949
    %1007 = vrot.lane.b32.xlu0 %v1004, 64
    %v1008 = vpop.permute.xlu0 %1007
    %v1010 = vmul.f32 %v1003, %v1008
    %1012 = vrot.lane.b32.xlu0 %v1010, 32
    %v1013 = vpop.permute.xlu0 %1012
    %v1015 = vadd.f32 %v1005, %v1013
    %v1016 = vtanh.pop %v1015
    %1018 = vrot.lane.b32.xlu0 %v1016, 64
    %v1019 = vpop.permute.xlu0 %1018
    %v1021 = vmul.f32 %v1003, %v1019
    %1023 = vrot.lane.b32.xlu0 %v1021, 32
    %v1024 = vpop.permute.xlu0 %1023
    %1026 = vst.msk [vmem:[#allocation2 + $0x4] sm:$0x1] %vm198, %v1024
    %v1027 = vld [vmem:[#allocation3 + $0x5] sm:$0x1]
    %v1028 = vsel %vm132, %v1024, 0
    %1030 = vmatpush.msra.mxu0 0.0
    %1031 = vmatpush.msra.mxu0 0.0
    %1032 = vmatpush.msra.mxu0 0.0
    %1033 = vmatpush.msra.mxu0 0.0
    %1034 = vmatpush.msra.mxu0 0.0
    %1035 = vmatpush.msra.mxu0 0.0
    %1036 = vmatpush.msra.mxu0 0.0
    %1037 = vmatpush.msra.mxu0 0.0
    %1038 = vmatpush.msra.mxu0 0.0
    %1039 = vmatpush.msra.mxu0 0.0
    %1040 = vmatpush.msra.mxu0 0.0
    %1041 = vmatpush.msra.mxu0 0.0
    %1042 = vmatpush.msra.mxu0 %v698
    %1043 = vmatpush.msra.mxu0 %v697
    %1044 = vmatpush.msra.mxu0 %v696
    %1045 = vmatpush.msra.mxu0 %v695
    %1046 = vmatmul.f32.gmra.mxu0 %v1028
    %v1047 = vpop.f32.mrf.mxu0
    %v1048 = vadd.f32 0.0, %v1047
    %1049 = vdwg.mxu0
    %v1050 = vadd.f32 %v1027, %v1048
    %v1051 = vxor.u32 %v1050, 2147483648
    %v1052 = vmul.f32 %v1051, 1.442695
    %v1053 = vpow.pop %v1052
    %v1054 = vadd.f32 %v1053, 1.0
    %v1055 = vrcp.pop %v1054
    %v1056 = vmul.f32 %v1054, %v1055
    %v1057 = vsub.f32 1.0, %v1056
    %v1058 = vmul.f32 %v1055, %v1057
    %v1059 = vadd.f32 %v1055, %v1058
    %vm1060 = vweird.f32 %v1054
    %vm1061 = vweird.f32 %v1055
    %vm1062 = vmor %vm1060, %vm1061
    %v1063 = vsel %vm1062, %v1055, %v1059
    %v1064 = vand.u32 2147483647, %v1054
    %vm1065 = vcmp.eq.f32.partialorder %v1064, 8.507059e+37
    %v1066 = vand.u32 %v1054, 2147483648
    %v1067 = vor.u32 1.1754944e-38, %v1066
    %v1068 = vsel %vm1065, %v1067, %v1063
    %v1069 = vmul.f32 1.0, %v1068
    %v1070 = vtanh.pop %v1050
    %v1071 = vmul.f32 %v1069, %v1015
    %1073 = vrot.lane.b32.xlu0 %v1070, 64
    %v1074 = vpop.permute.xlu0 %1073
    %v1076 = vmul.f32 %v1069, %v1074
    %1078 = vrot.lane.b32.xlu0 %v1076, 32
    %v1079 = vpop.permute.xlu0 %1078
    %v1081 = vadd.f32 %v1071, %v1079
    %v1082 = vtanh.pop %v1081
    %1084 = vrot.lane.b32.xlu0 %v1082, 64
    %v1085 = vpop.permute.xlu0 %1084
    %v1087 = vmul.f32 %v1069, %v1085
    %1089 = vrot.lane.b32.xlu0 %v1087, 32
    %v1090 = vpop.permute.xlu0 %1089
    %1092 = vst.msk [vmem:[#allocation2 + $0x5] sm:$0x1] %vm198, %v1090
    %v1093 = vld [vmem:[#allocation3 + $0x6] sm:$0x1]
    %v1094 = vsel %vm132, %v1090, 0
    %1096 = vmatpush.msra.mxu0 0.0
    %1097 = vmatpush.msra.mxu0 0.0
    %1098 = vmatpush.msra.mxu0 0.0
    %1099 = vmatpush.msra.mxu0 0.0
    %1100 = vmatpush.msra.mxu0 0.0
    %1101 = vmatpush.msra.mxu0 0.0
    %1102 = vmatpush.msra.mxu0 0.0
    %1103 = vmatpush.msra.mxu0 0.0
    %1104 = vmatpush.msra.mxu0 0.0
    %1105 = vmatpush.msra.mxu0 0.0
    %1106 = vmatpush.msra.mxu0 0.0
    %1107 = vmatpush.msra.mxu0 0.0
    %1108 = vmatpush.msra.mxu0 %v698
    %1109 = vmatpush.msra.mxu0 %v697
    %1110 = vmatpush.msra.mxu0 %v696
    %1111 = vmatpush.msra.mxu0 %v695
    %1112 = vmatmul.f32.gmra.mxu0 %v1094
    %v1113 = vpop.f32.mrf.mxu0
    %v1114 = vadd.f32 0.0, %v1113
    %1115 = vdwg.mxu0
    %v1116 = vadd.f32 %v1093, %v1114
    %v1117 = vxor.u32 %v1116, 2147483648
    %v1118 = vmul.f32 %v1117, 1.442695
    %v1119 = vpow.pop %v1118
    %v1120 = vadd.f32 %v1119, 1.0
    %v1121 = vrcp.pop %v1120
    %v1122 = vmul.f32 %v1120, %v1121
    %v1123 = vsub.f32 1.0, %v1122
    %v1124 = vmul.f32 %v1121, %v1123
    %v1125 = vadd.f32 %v1121, %v1124
    %vm1126 = vweird.f32 %v1120
    %vm1127 = vweird.f32 %v1121
    %vm1128 = vmor %vm1126, %vm1127
    %v1129 = vsel %vm1128, %v1121, %v1125
    %v1130 = vand.u32 2147483647, %v1120
    %vm1131 = vcmp.eq.f32.partialorder %v1130, 8.507059e+37
    %v1132 = vand.u32 %v1120, 2147483648
    %v1133 = vor.u32 1.1754944e-38, %v1132
    %v1134 = vsel %vm1131, %v1133, %v1129
    %v1135 = vmul.f32 1.0, %v1134
    %v1136 = vtanh.pop %v1116
    %v1137 = vmul.f32 %v1135, %v1081
    %1139 = vrot.lane.b32.xlu0 %v1136, 64
    %v1140 = vpop.permute.xlu0 %1139
    %v1142 = vmul.f32 %v1135, %v1140
    %1144 = vrot.lane.b32.xlu0 %v1142, 32
    %v1145 = vpop.permute.xlu0 %1144
    %v1147 = vadd.f32 %v1137, %v1145
    %v1148 = vtanh.pop %v1147
    %1150 = vrot.lane.b32.xlu0 %v1148, 64
    %v1151 = vpop.permute.xlu0 %1150
    %v1153 = vmul.f32 %v1135, %v1151
    %1155 = vrot.lane.b32.xlu0 %v1153, 32
    %v1156 = vpop.permute.xlu0 %1155
    %1158 = vst.msk [vmem:[#allocation2 + $0x6] sm:$0x1] %vm198, %v1156
    %v1159 = vld [vmem:[#allocation3 + $0x7] sm:$0x1]
    %v1160 = vsel %vm132, %v1156, 0
    %1162 = vmatpush.msra.mxu0 0.0
    %1163 = vmatpush.msra.mxu0 0.0
    %1164 = vmatpush.msra.mxu0 0.0
    %1165 = vmatpush.msra.mxu0 0.0
    %1166 = vmatpush.msra.mxu0 0.0
    %1167 = vmatpush.msra.mxu0 0.0
    %1168 = vmatpush.msra.mxu0 0.0
    %1169 = vmatpush.msra.mxu0 0.0
    %1170 = vmatpush.msra.mxu0 0.0
    %1171 = vmatpush.msra.mxu0 0.0
    %1172 = vmatpush.msra.mxu0 0.0
    %1173 = vmatpush.msra.mxu0 0.0
    %1174 = vmatpush.msra.mxu0 %v698
    %1175 = vmatpush.msra.mxu0 %v697
    %1176 = vmatpush.msra.mxu0 %v696
    %1177 = vmatpush.msra.mxu0 %v695
    %1178 = vmatmul.f32.gmra.mxu0 %v1160
    %v1179 = vpop.f32.mrf.mxu0
    %v1180 = vadd.f32 0.0, %v1179
    %1181 = vdwg.mxu0
    %v1182 = vadd.f32 %v1159, %v1180
    %v1183 = vxor.u32 %v1182, 2147483648
    %v1184 = vmul.f32 %v1183, 1.442695
    %v1185 = vpow.pop %v1184
    %v1186 = vadd.f32 %v1185, 1.0
    %v1187 = vrcp.pop %v1186
    %v1188 = vmul.f32 %v1186, %v1187
    %v1189 = vsub.f32 1.0, %v1188
    %v1190 = vmul.f32 %v1187, %v1189
    %v1191 = vadd.f32 %v1187, %v1190
    %vm1192 = vweird.f32 %v1186
    %vm1193 = vweird.f32 %v1187
    %vm1194 = vmor %vm1192, %vm1193
    %v1195 = vsel %vm1194, %v1187, %v1191
    %v1196 = vand.u32 2147483647, %v1186
    %vm1197 = vcmp.eq.f32.partialorder %v1196, 8.507059e+37
    %v1198 = vand.u32 %v1186, 2147483648
    %v1199 = vor.u32 1.1754944e-38, %v1198
    %v1200 = vsel %vm1197, %v1199, %v1195
    %v1201 = vmul.f32 1.0, %v1200
    %v1202 = vtanh.pop %v1182
    %v1203 = vmul.f32 %v1201, %v1147
    %1205 = vrot.lane.b32.xlu0 %v1202, 64
    %v1206 = vpop.permute.xlu0 %1205
    %v1208 = vmul.f32 %v1201, %v1206
    %1210 = vrot.lane.b32.xlu0 %v1208, 32
    %v1211 = vpop.permute.xlu0 %1210
    %v1213 = vadd.f32 %v1203, %v1211
    %v1214 = vtanh.pop %v1213
    %1216 = vrot.lane.b32.xlu0 %v1214, 64
    %v1217 = vpop.permute.xlu0 %1216
    %v1219 = vmul.f32 %v1201, %v1217
    %1221 = vrot.lane.b32.xlu0 %v1219, 32
    %v1222 = vpop.permute.xlu0 %1221
    %1224 = vst.msk [vmem:[#allocation2 + $0x7] sm:$0x1] %vm198, %v1222
    %v1225 = vld [vmem:[#allocation2] sm:$0xff]
    %v1226 = vld [vmem:[%s7] sm:$0xff]
    %v1227 = vld [vmem:[%s7 + $0x8] sm:$0xff]
    %v1228 = vld [vmem:[%s7 + $0x10] sm:$0xff]
    %v1229 = vld [vmem:[%s7 + $0x18] sm:$0xff]
    %v1230 = vld [vmem:[#allocation4] sm:$0x1]
    %v1232 = vperm.slane %v1230, 0
    %v1235 = vsel %vm132, %v1225, 0
    %1237 = vmatpush.msra.mxu0 0.0
    %1238 = vmatpush.msra.mxu0 0.0
    %1239 = vmatpush.msra.mxu0 0.0
    %1240 = vmatpush.msra.mxu0 0.0
    %1241 = vmatpush.msra.mxu0 0.0
    %1242 = vmatpush.msra.mxu0 0.0
    %1243 = vmatpush.msra.mxu0 0.0
    %1244 = vmatpush.msra.mxu0 0.0
    %1245 = vmatpush.msra.mxu0 0.0
    %1246 = vmatpush.msra.mxu0 0.0
    %1247 = vmatpush.msra.mxu0 0.0
    %1248 = vmatpush.msra.mxu0 0.0
    %1249 = vmatpush.msra.mxu0 %v1229
    %1250 = vmatpush.msra.mxu0 %v1228
    %1251 = vmatpush.msra.mxu0 %v1227
    %1252 = vmatpush.msra.mxu0 %v1226
    %1253 = vmatmul.f32.gmra.mxu0 %v1235
    %v1254 = vpop.f32.mrf.mxu0
    %v1255 = vadd.f32 %v1232, %v1254
    %1256 = vdwg.mxu0
    %vm1257 = vcmask 7168
    %1258 = vst.msk [vmem:[%s9] sm:$0xff] %vm1257, %v1255
    // Predicated region
    $region54: #{tpu_custom_call.1} parent=1 // pred_check
      _
    $region55: #{tpu_custom_call.1} parent=1 // pred_check_branch
      %1260 = sbr.rel (0) target = $region57
    $region56: #{tpu_custom_call.1} parent=1 // pred_region
      _
    $region57: #{tpu_custom_call.1} parent=1 // pred_fallthru
      _
    // Predicated region
    $region58: #{tpu_custom_call.1} parent=1 // pred_check
      _
    $region59: #{tpu_custom_call.1} parent=1 // pred_check_branch
      %1262 = sbr.rel (0) target = $region61
    $region60: #{tpu_custom_call.1} parent=1 // pred_region
      _
    $region61: #{tpu_custom_call.1} parent=1 // pred_fallthru
      _
    %1263 = vsyncpa [#allocation6], 1
    %1264 = vsyncpa [#allocation8], 1
    %1265 = vsyncpa [#allocation11], 1

</llo_original>
